<compile_context>
chip_gen: v7x
topology: tpu7x:2x2x1
jax: 0.10.0
libtpu: 0.0.40
codegen_flags: <defaults>
</compile_context>

<pallas_src>
import functools

import jax
import jax.numpy as jnp
from jax import lax
from jax.experimental import pallas as pl
from jax.experimental.pallas import tpu as pltpu

# ------------------------- mode constants (ReadPointerAgent) ----------------
ACT_MODE = "act"
READ_MODE = "read"

# ------------------------------- dimensions ---------------------------------
B = 2                      # batch
T = 4                      # image sequence length
C, H, W = 3, 16, 16        # per-frame image
CHW = C * H * W            # 768 (multiple of 128 -> lane aligned)
IMG_EMB = 32               # image_module / recurrence hidden size
SYM_VOCAB, SYM_EMB = 20, 32
TXT_VOCAB, TXT_EMB = 30, 32
N_ACT_TOKENS, ACT_EMB = 5, 16
TEXT_EMB = SYM_EMB + TXT_EMB                 # 64
TOTAL_EMB = IMG_EMB + TEXT_EMB + ACT_EMB     # 112 (total_emb_size)
HIDDEN = 512
NUM_ACTIONS = 8
HEAD_WIDTH = 128           # lane-dense per-head width (act: 8 valid, read: 2)
NEG_INF = -1e30            # f32 pad bias -> exp underflows to exactly 0

ENC_ROWS = CHW + 2 * IMG_EMB          # 832: [img_w | rnn_wx | rnn_wh]
ACT_ROWS = 16                         # action one-hot block, padded to 16 rows
D1_ROWS = IMG_EMB + TEXT_EMB + ACT_ROWS   # 112: packed dense1


# ======================= fused multi-step Pallas kernel ======================
def _decode_kernel(lens_ref, act_ref, img_ref, h0_ref, text_ref,
                   w_enc_ref, w_d1_ref, w_head_ref, bias_ref,
                   img_seq_out, h_out, x_out, logp_out,
                   xw_ref, base_ref):
    s = pl.program_id(0)
    f32, bf16 = jnp.float32, jnp.bfloat16

    # ---- first grid step: initialise the resident carries -------------------
    @pl.when(s == 0)
    def _():
        h_out[...] = h0_ref[...]                       # recurrent hidden state
        # text_emb and b1 are constant across decode steps: precompute their
        # dense1 contribution once into persistent VMEM scratch.
        base_ref[...] = (
            jnp.dot(text_ref[...].astype(bf16),
                    w_d1_ref[IMG_EMB:IMG_EMB + TEXT_EMB, :],
                    preferred_element_type=f32)
            + bias_ref[2:3, :])                        # + b1

    img_b = bias_ref[0:1, 0:IMG_EMB]                   # (1, 32)
    rnn_b = bias_ref[1:2, 0:IMG_EMB]                   # (1, 32)
    b_head = bias_ref[3:4, 0:2 * HEAD_WIDTH]           # (1, 256), f32 (-1e30 pads)

    # ---- image_module: one projection over all B*T frames (batch-major) -----
    proj = jnp.tanh(
        jnp.dot(img_ref[...].astype(bf16), w_enc_ref[0:CHW, :],
                preferred_element_type=f32) + img_b)   # (B*T, 32)
    img_seq_out[...] = proj

    # ---- image_recurrence_module: masked tanh RNN, statically unrolled ------
    # input-side matmul hoisted out of the serial loop (one MXU push for all T)
    xw_ref[...] = (jnp.dot(proj.astype(bf16), w_enc_ref[CHW:CHW + IMG_EMB, :],
                           preferred_element_type=f32) + rnn_b)   # (B*T, 32)
    wh = w_enc_ref[CHW + IMG_EMB:ENC_ROWS, :]          # (32, 32) bf16

    lens = lens_ref[...]                               # (B, 1) int32
    h = h_out[...]                                     # (B, 32) f32 carry
    for t in range(T):                                 # static unroll (T == 4)
        # batch-major rows b*T + t for all b: strided sublane read
        x_t = xw_ref[pl.ds(t, B, stride=T), :]         # (B, 32)
        upd = jnp.tanh(x_t + jnp.dot(h.astype(bf16), wh,
                                     preferred_element_type=f32))
        h = jnp.where(t < lens, upd, h)                # padded frames do not update
    image_emb = h                                      # state at t = lens-1
    h_out[...] = h                                     # new incremental hidden state

    # ---- dense1: concat folded into partial matmuls; action folded into w1 --
    # TODO(synk): prev_action outside [0, N_ACT_TOKENS) yields a zero action
    # contribution (used here as the "no previous action" sentinel).
    a_iota = lax.broadcasted_iota(jnp.int32, (B, ACT_ROWS), 1)
    onehot = (a_iota == act_ref[...]).astype(bf16)     # (B, 16)
    acc = base_ref[...]                                # text @ w1_txt + b1
    acc = acc + jnp.dot(image_emb.astype(bf16), w_d1_ref[0:IMG_EMB, :],
                        preferred_element_type=f32)
    acc = acc + jnp.dot(onehot, w_d1_ref[IMG_EMB + TEXT_EMB:D1_ROWS, :],
                        preferred_element_type=f32)
    x = jnp.maximum(acc, 0.0)                          # ReLU, (B, 512)
    x_out[...] = x

    # ---- both heads in one 256-wide MXU push + per-head log_softmax ---------
    logits = (jnp.dot(x.astype(bf16), w_head_ref[...],
                      preferred_element_type=f32) + b_head)       # (B, 256)

    def _log_softmax(z):
        m = jnp.max(z, axis=-1, keepdims=True)
        return z - (jnp.log(jnp.sum(jnp.exp(z - m), axis=-1, keepdims=True)) + m)

    logp_out[:, 0:HEAD_WIDTH] = _log_softmax(logits[:, 0:HEAD_WIDTH])
    logp_out[:, HEAD_WIDTH:2 * HEAD_WIDTH] = _log_softmax(
        logits[:, HEAD_WIDTH:2 * HEAD_WIDTH])


def _step_spec(shape):
    """Per-step operand: leading step axis selected by the grid index."""
    n = len(shape)
    return pl.BlockSpec((None,) + tuple(shape), lambda s, _n=n: (s,) + (0,) * _n)


def _const_spec(shape):
    """Resident operand: constant index_map -> DMA'd once, stays in VMEM."""
    zeros = (0,) * len(shape)
    return pl.BlockSpec(tuple(shape), lambda s, _z=zeros: _z)


@functools.lru_cache(maxsize=None)
def _build_decode(num_steps):
    S = num_steps
    in_specs = [
        _step_spec((B, 1)),                    # image_lens (int32)
        _step_spec((B, 1)),                    # prev_action (int32)
        _step_spec((B * T, CHW)),              # image frames, batch-major
        _const_spec((B, IMG_EMB)),             # h0
        _const_spec((B, TEXT_EMB)),            # text_emb
        _const_spec((ENC_ROWS, IMG_EMB)),      # packed img_w|rnn_wx|rnn_wh (bf16)
        _const_spec((D1_ROWS, HIDDEN)),        # packed dense1 (bf16, action folded)
        _const_spec((HIDDEN, 2 * HEAD_WIDTH)), # stacked act|read head (bf16)
        _const_spec((4, HIDDEN)),              # packed f32 biases
    ]
    out_specs = (
        _step_spec((B * T, IMG_EMB)),          # image_emb_seq (per step)
        _const_spec((B, IMG_EMB)),             # hidden-state carry (resident)
        _step_spec((B, HIDDEN)),               # x = relu(dense1)
        _step_spec((B, 2 * HEAD_WIDTH)),       # padded [act | read] log-probs
    )
    out_shape = (
        jax.ShapeDtypeStruct((S, B * T, IMG_EMB), jnp.float32),
        jax.ShapeDtypeStruct((B, IMG_EMB), jnp.float32),
        jax.ShapeDtypeStruct((S, B, HIDDEN), jnp.float32),
        jax.ShapeDtypeStruct((S, B, 2 * HEAD_WIDTH), jnp.float32),
    )
    flops = 2 * S * (B * T * CHW * IMG_EMB + 2 * B * T * IMG_EMB * IMG_EMB
                     + B * IMG_EMB * HIDDEN + B * ACT_ROWS * HIDDEN
                     + B * HIDDEN * 2 * HEAD_WIDTH) + 2 * B * TEXT_EMB * HIDDEN
    bytes_accessed = (
        2 * (ENC_ROWS * IMG_EMB + D1_ROWS * HIDDEN + HIDDEN * 2 * HEAD_WIDTH)
        + 4 * 4 * HIDDEN
        + 4 * S * (B * T * CHW + B * T * IMG_EMB
                   + B * (2 + HIDDEN + 2 * HEAD_WIDTH))
        + 4 * 2 * B * (IMG_EMB + TEXT_EMB))
    return pl.pallas_call(
        _decode_kernel,
        grid_spec=pltpu.PrefetchScalarGridSpec(
            num_scalar_prefetch=0,
            grid=(S,),
            in_specs=in_specs,
            out_specs=out_specs,
            scratch_shapes=[pltpu.VMEM((B * T, IMG_EMB), jnp.float32),  # xw
                            pltpu.VMEM((B, HIDDEN), jnp.float32)],      # base
        ),
        out_shape=out_shape,
        compiler_params=pltpu.CompilerParams(
            dimension_semantics=("arbitrary",)),
        cost_estimate=pl.CostEstimate(
            flops=flops,
            transcendentals=S * (2 * B * T * IMG_EMB + 2 * B * HEAD_WIDTH),
            bytes_accessed=bytes_accessed),
    )


# ==================== deterministic parameter creation =======================
def init_params(key):
    ks = jax.random.split(key, 14)
    s = 0.05
    f32, bf16 = jnp.float32, jnp.bfloat16
    normal = jax.random.normal

    img_w = s * normal(ks[0], (CHW, IMG_EMB), f32)
    img_b = s * normal(ks[1], (IMG_EMB,), f32)
    rnn_wx = s * normal(ks[2], (IMG_EMB, IMG_EMB), f32)
    rnn_wh = s * normal(ks[3], (IMG_EMB, IMG_EMB), f32)
    rnn_b = s * normal(ks[4], (IMG_EMB,), f32)
    sym_emb = s * normal(ks[5], (SYM_VOCAB, SYM_EMB), f32)
    txt_emb = s * normal(ks[6], (TXT_VOCAB, TXT_EMB), f32)
    act_emb = s * normal(ks[7], (N_ACT_TOKENS, ACT_EMB), f32)
    w1 = s * normal(ks[8], (TOTAL_EMB, HIDDEN), f32)
    b1 = s * normal(ks[9], (HIDDEN,), f32)
    w2 = s * normal(ks[10], (HIDDEN, NUM_ACTIONS), f32)
    b2 = s * normal(ks[11], (NUM_ACTIONS,), f32)
    w_read = s * normal(ks[12], (HIDDEN, 2), f32)
    b_read = s * normal(ks[13], (2,), f32)

    # packed encoder weights: [image projection | rnn input | rnn recurrent]
    w_enc = jnp.concatenate([img_w, rnn_wx, rnn_wh], axis=0).astype(bf16)

    # dense1 with the concat folded away; the action-embedding lookup is folded
    # algebraically: onehot(prev) @ (act_emb @ w1_act)  ==  action_emb @ w1_act
    w1_img = w1[:IMG_EMB]
    w1_txt = w1[IMG_EMB:IMG_EMB + TEXT_EMB]
    w1_act = w1[IMG_EMB + TEXT_EMB:]
    w1_act_fused = jnp.zeros((ACT_ROWS, HIDDEN), f32)
    w1_act_fused = w1_act_fused.at[:N_ACT_TOKENS].set(act_emb @ w1_act)
    w_d1 = jnp.concatenate([w1_img, w1_txt, w1_act_fused], axis=0).astype(bf16)

    # stacked lane-dense head: cols [0,128) act (8 valid), [128,256) read (2)
    w_head = jnp.zeros((HIDDEN, 2 * HEAD_WIDTH), f32)
    w_head = w_head.at[:, :NUM_ACTIONS].set(w2)
    w_head = w_head.at[:, HEAD_WIDTH:HEAD_WIDTH + 2].set(w_read)
    w_head = w_head.astype(bf16)

    b_head = jnp.full((2 * HEAD_WIDTH,), NEG_INF, f32)   # stays f32
    b_head = b_head.at[:NUM_ACTIONS].set(b2)
    b_head = b_head.at[HEAD_WIDTH:HEAD_WIDTH + 2].set(b_read)

    # packed f32 biases: row0 img_b, row1 rnn_b, row2 b1, row3 head biases
    biases = jnp.zeros((4, HIDDEN), f32)
    biases = biases.at[0, :IMG_EMB].set(img_b)
    biases = biases.at[1, :IMG_EMB].set(rnn_b)
    biases = biases.at[2, :].set(b1)
    biases = biases.at[3, :2 * HEAD_WIDTH].set(b_head)

    return {"sym_emb": sym_emb, "txt_emb": txt_emb,
            "w_enc": w_enc, "w_d1": w_d1, "w_head": w_head, "biases": biases}


# ============================ text encoders (JAX) ============================
def encode_text(p, symbolic_instructions, real_instructions):
    # TODO(synk): symbolic_text_module / lstm_text_module are injected external
    # encoders; deterministic mean-pool embedding stand-ins run in plain JAX
    # (first incremental step only, then cached in model_state).
    sym = jnp.mean(p["sym_emb"][symbolic_instructions], axis=1)
    txt = jnp.mean(p["txt_emb"][real_instructions], axis=1)
    return jnp.concatenate([sym, txt], axis=1)


# ============================== forward pass =================================
@functools.partial(jax.jit, static_argnames=("mode",))
def forward(p, image, image_lens, symbolic_instructions, real_instructions,
            prev_action, mode, model_state):
    """Single incremental step — exact semantics of the PyTorch forward()."""
    img_flat = image.reshape(1, B * T, CHW)        # batch-major, free reshape

    if model_state is None:
        text_emb = encode_text(p, symbolic_instructions, real_instructions)
        h0 = jnp.zeros((B, IMG_EMB), jnp.float32)
    else:
        text_emb, h0 = model_state

    lens = image_lens.reshape(1, B, 1).astype(jnp.int32)
    prev = prev_action.reshape(1, B, 1).astype(jnp.int32)

    fused = _build_decode(1)
    img_seq, h_new, x, logp_full = fused(
        lens, prev, img_flat, h0, text_emb,
        p["w_enc"], p["w_d1"], p["w_head"], p["biases"])

    image_emb_seq = img_seq.reshape(B, T, IMG_EMB)
    x = x[0]
    if mode is None or mode == ACT_MODE:
        logp = logp_full[0, :, :NUM_ACTIONS]
    elif mode == READ_MODE:
        logp = logp_full[0, :, HEAD_WIDTH:HEAD_WIDTH + 2]
    else:
        raise ValueError("invalid mode for model: %r" % mode)
    new_model_state = (text_emb, h_new)
    return logp, new_model_state, image_emb_seq, x


@jax.jit
def forward_rollout(p, images, image_lens, prev_actions, model_state):
    """S teacher-forced decode steps in ONE pallas_call: weights stay
    VMEM-resident, the hidden state is carried in a grid-resident block."""
    S = images.shape[0]
    img_flat = images.reshape(S, B * T, CHW)
    text_emb, h0 = model_state
    lens = image_lens.reshape(S, B, 1).astype(jnp.int32)
    prev = prev_actions.reshape(S, B, 1).astype(jnp.int32)

    fused = _build_decode(S)
    img_seq, h_new, x, logp_full = fused(
        lens, prev, img_flat, h0, text_emb,
        p["w_enc"], p["w_d1"], p["w_head"], p["biases"])

    act_logp = logp_full[:, :, :NUM_ACTIONS]
    read_logp = logp_full[:, :, HEAD_WIDTH:HEAD_WIDTH + 2]
    return (act_logp, read_logp, (text_emb, h_new),
            img_seq.reshape(S, B, T, IMG_EMB), x)


# ================================== main =====================================
if __name__ == "__main__":
    key = jax.random.PRNGKey(0)
    pkey, k_img, k_sym, k_txt, k_act, k_rimg, k_ract = jax.random.split(key, 7)
    params = init_params(pkey)

    image = jax.random.normal(k_img, (B, T, C, H, W), jnp.float32)
    image_lens = jnp.array([T, T - 1], jnp.int32)
    symbolic_instructions = jax.random.randint(k_sym, (B, 6), 0, SYM_VOCAB)
    real_instructions = jax.random.randint(k_txt, (B, 6), 0, TXT_VOCAB)
    prev_action = jax.random.randint(k_act, (B,), 0, N_ACT_TOKENS)

    # single-step: first call with no model_state (ACT), then READ with state.
    logp_act, state, img_seq, x_feat = forward(
        params, image, image_lens, symbolic_instructions, real_instructions,
        prev_action, ACT_MODE, None)
    logp_read, state2, _, _ = forward(
        params, image, image_lens, symbolic_instructions, real_instructions,
        prev_action, READ_MODE, state)
    jax.block_until_ready((logp_act, logp_read))

    assert logp_act.shape == (B, NUM_ACTIONS)
    assert logp_read.shape == (B, 2)
    assert x_feat.shape == (B, HIDDEN)
    assert img_seq.shape == (B, T, IMG_EMB)
    assert jnp.allclose(jnp.sum(jnp.exp(logp_act), axis=-1), 1.0, atol=1e-4)
    assert jnp.allclose(jnp.sum(jnp.exp(logp_read), axis=-1), 1.0, atol=1e-4)

    # multi-step decode: S steps in one kernel launch, verified against S
    # sequential single-step forward() calls (checks the resident h carry).
    S = 4
    roll_images = jax.random.normal(k_rimg, (S, B, T, C, H, W), jnp.float32)
    roll_lens = jnp.array([[4, 3], [2, 4], [4, 1], [3, 4]], jnp.int32)
    roll_actions = jax.random.randint(k_ract, (S, B), 0, N_ACT_TOKENS)

    init_state = (encode_text(params, symbolic_instructions, real_instructions),
                  jnp.zeros((B, IMG_EMB), jnp.float32))
    act_lp, read_lp, final_state, roll_seq, roll_x = forward_rollout(
        params, roll_images, roll_lens, roll_actions, init_state)
    jax.block_until_ready((act_lp, read_lp, final_state))

    state_ref = init_state
    for step in range(S):
        lp_s, state_ref, _, x_s = forward(
            params, roll_images[step], roll_lens[step], symbolic_instructions,
            real_instructions, roll_actions[step], ACT_MODE, state_ref)
        assert jnp.allclose(lp_s, act_lp[step], atol=1e-4, rtol=1e-4)
        assert jnp.allclose(x_s, roll_x[step], atol=1e-4, rtol=1e-4)
    assert jnp.allclose(state_ref[1], final_state[1], atol=1e-4, rtol=1e-4)
    assert jnp.allclose(jnp.sum(jnp.exp(read_lp), axis=-1), 1.0, atol=1e-4)

    print("KERNEL_OK")
</pallas_src>

<mosaic_0001>
module attributes {stable_mosaic.version = 11 : i64} {
  func.func @_decode_kernel(%arg0: i32, %arg1: memref<1x2x1xi32, #tpu.memory_space<vmem>>, %arg2: memref<1x2x1xi32, #tpu.memory_space<vmem>>, %arg3: memref<1x8x768xf32, #tpu.memory_space<vmem>>, %arg4: memref<2x32xf32, #tpu.memory_space<vmem>>, %arg5: memref<2x64xf32, #tpu.memory_space<vmem>>, %arg6: memref<832x32xbf16, #tpu.memory_space<vmem>>, %arg7: memref<112x512xbf16, #tpu.memory_space<vmem>>, %arg8: memref<512x256xbf16, #tpu.memory_space<vmem>>, %arg9: memref<4x512xf32, #tpu.memory_space<vmem>>, %arg10: memref<1x8x32xf32, #tpu.memory_space<vmem>>, %arg11: memref<2x32xf32, #tpu.memory_space<vmem>>, %arg12: memref<1x2x512xf32, #tpu.memory_space<vmem>>, %arg13: memref<1x2x256xf32, #tpu.memory_space<vmem>>, %arg14: memref<8x32xf32, #tpu.memory_space<vmem>>, %arg15: memref<2x512xf32, #tpu.memory_space<vmem>>) attributes {dimension_semantics = [#tpu.dimension_semantics<arbitrary>], iteration_bounds = array<i64: 1>, scalar_prefetch = 0 : i64, scratch_operands = 2 : i64, tpu.core_type = #tpu.core_type<tc>, window_params = [{transform_indices = @transform_0, window_bounds = array<i64: 1, 2, 1>}, {transform_indices = @transform_1, window_bounds = array<i64: 1, 2, 1>}, {transform_indices = @transform_2, window_bounds = array<i64: 1, 8, 768>}, {pipeline_mode = #tpu.pipeline_mode<synchronous>, transform_indices = @transform_3, window_bounds = array<i64: 2, 32>}, {pipeline_mode = #tpu.pipeline_mode<synchronous>, transform_indices = @transform_4, window_bounds = array<i64: 2, 64>}, {pipeline_mode = #tpu.pipeline_mode<synchronous>, transform_indices = @transform_5, window_bounds = array<i64: 832, 32>}, {pipeline_mode = #tpu.pipeline_mode<synchronous>, transform_indices = @transform_6, window_bounds = array<i64: 112, 512>}, {pipeline_mode = #tpu.pipeline_mode<synchronous>, transform_indices = @transform_7, window_bounds = array<i64: 512, 256>}, {pipeline_mode = #tpu.pipeline_mode<synchronous>, transform_indices = @transform_8, window_bounds = array<i64: 4, 512>}, {transform_indices = @transform_9, window_bounds = array<i64: 1, 8, 32>}, {pipeline_mode = #tpu.pipeline_mode<synchronous>, transform_indices = @transform_10, window_bounds = array<i64: 2, 32>}, {transform_indices = @transform_11, window_bounds = array<i64: 1, 2, 512>}, {transform_indices = @transform_12, window_bounds = array<i64: 1, 2, 256>}]} {
    %c0_i32 = arith.constant 0 : i32
    %0 = arith.cmpi eq, %arg0, %c0_i32 : i32
    %1 = arith.extui %0 : i1 to i32
    %c0_i32_0 = arith.constant 0 : i32
    %2 = arith.cmpi ne, %1, %c0_i32_0 : i32
    scf.if %2 {
      %c0_62 = arith.constant 0 : index
      %c0_63 = arith.constant 0 : index
      %124 = vector.load %arg4[%c0_62, %c0_63] : memref<2x32xf32, #tpu.memory_space<vmem>>, vector<2x32xf32>
      %c0_64 = arith.constant 0 : index
      %c0_65 = arith.constant 0 : index
      %125 = vector.load %arg11[%c0_64, %c0_65] : memref<2x32xf32, #tpu.memory_space<vmem>>, vector<2x32xf32>
      tpu.vector_store %arg11[%c0_64, %c0_65], %124 {strides = array<i32>} : memref<2x32xf32, #tpu.memory_space<vmem>>, vector<2x32xf32>,
      %c0_66 = arith.constant 0 : index
      %c0_67 = arith.constant 0 : index
      %126 = vector.load %arg5[%c0_66, %c0_67] : memref<2x64xf32, #tpu.memory_space<vmem>>, vector<2x64xf32>
      %127 = arith.truncf %126 : vector<2x64xf32> to vector<2x64xbf16>
      %c32 = arith.constant 32 : index
      %c0_68 = arith.constant 0 : index
      %128 = vector.load %arg7[%c32, %c0_68] : memref<112x512xbf16, #tpu.memory_space<vmem>>, vector<64x512xbf16>
      %cst_69 = arith.constant dense<0.000000e+00> : vector<2x512xf32>
      %129 = tpu.matmul %127, %128, %cst_69 {dimension_numbers = #tpu.dot_dimension_numbers<[1], [0], [0], [1], [0, 0, 1, 1], [], []>} : vector<2x64xbf16>, vector<64x512xbf16>, vector<2x512xf32> -> vector<2x512xf32>
      %c2_70 = arith.constant 2 : index
      %c0_71 = arith.constant 0 : index
      %130 = vector.load %arg9[%c2_70, %c0_71] : memref<4x512xf32, #tpu.memory_space<vmem>>, vector<1x512xf32>
      %131 = vector.broadcast %130 : vector<1x512xf32> to vector<2x512xf32>
      %132 = arith.addf %129, %131 : vector<2x512xf32>
      %c0_72 = arith.constant 0 : index
      %c0_73 = arith.constant 0 : index
      %133 = vector.load %arg15[%c0_72, %c0_73] : memref<2x512xf32, #tpu.memory_space<vmem>>, vector<2x512xf32>
      tpu.vector_store %arg15[%c0_72, %c0_73], %132 {strides = array<i32>} : memref<2x512xf32, #tpu.memory_space<vmem>>, vector<2x512xf32>,
    } else {
    }
    %c0 = arith.constant 0 : index
    %c0_1 = arith.constant 0 : index
    %3 = vector.load %arg9[%c0, %c0_1] : memref<4x512xf32, #tpu.memory_space<vmem>>, vector<1x32xf32>
    %c1 = arith.constant 1 : index
    %c0_2 = arith.constant 0 : index
    %4 = vector.load %arg9[%c1, %c0_2] : memref<4x512xf32, #tpu.memory_space<vmem>>, vector<1x32xf32>
    %c3 = arith.constant 3 : index
    %c0_3 = arith.constant 0 : index
    %5 = vector.load %arg9[%c3, %c0_3] : memref<4x512xf32, #tpu.memory_space<vmem>>, vector<1x256xf32>
    %c0_4 = arith.constant 0 : index
    %c0_5 = arith.constant 0 : index
    %c0_6 = arith.constant 0 : index
    %6 = vector.load %arg3[%c0_4, %c0_5, %c0_6] : memref<1x8x768xf32, #tpu.memory_space<vmem>>, vector<1x8x768xf32>
    %7 = vector.shape_cast %6 : vector<1x8x768xf32> to vector<8x768xf32>
    %8 = arith.truncf %7 : vector<8x768xf32> to vector<8x768xbf16>
    %c0_7 = arith.constant 0 : index
    %c0_8 = arith.constant 0 : index
    %9 = vector.load %arg6[%c0_7, %c0_8] : memref<832x32xbf16, #tpu.memory_space<vmem>>, vector<768x32xbf16>
    %cst = arith.constant dense<0.000000e+00> : vector<8x32xf32>
    %10 = tpu.matmul %8, %9, %cst {dimension_numbers = #tpu.dot_dimension_numbers<[1], [0], [0], [1], [0, 0, 1, 1], [], []>} : vector<8x768xbf16>, vector<768x32xbf16>, vector<8x32xf32> -> vector<8x32xf32>
    %11 = vector.broadcast %3 : vector<1x32xf32> to vector<8x32xf32>
    %12 = arith.addf %10, %11 : vector<8x32xf32>
    %13 = math.tanh %12 : vector<8x32xf32>
    %c0_9 = arith.constant 0 : index
    %c0_10 = arith.constant 0 : index
    %c0_11 = arith.constant 0 : index
    %14 = vector.load %arg10[%c0_9, %c0_10, %c0_11] : memref<1x8x32xf32, #tpu.memory_space<vmem>>, vector<1x8x32xf32>
    %15 = vector.shape_cast %14 : vector<1x8x32xf32> to vector<8x32xf32>
    %16 = vector.shape_cast %13 : vector<8x32xf32> to vector<1x8x32xf32>
    tpu.vector_store %arg10[%c0_9, %c0_10, %c0_11], %16 {strides = array<i32>} : memref<1x8x32xf32, #tpu.memory_space<vmem>>, vector<1x8x32xf32>,
    %17 = arith.truncf %13 : vector<8x32xf32> to vector<8x32xbf16>
    %c768 = arith.constant 768 : index
    %c0_12 = arith.constant 0 : index
    %18 = vector.load %arg6[%c768, %c0_12] : memref<832x32xbf16, #tpu.memory_space<vmem>>, vector<32x32xbf16>
    %cst_13 = arith.constant dense<0.000000e+00> : vector<8x32xf32>
    %19 = tpu.matmul %17, %18, %cst_13 {dimension_numbers = #tpu.dot_dimension_numbers<[1], [0], [0], [1], [0, 0, 1, 1], [], []>} : vector<8x32xbf16>, vector<32x32xbf16>, vector<8x32xf32> -> vector<8x32xf32>
    %20 = vector.broadcast %4 : vector<1x32xf32> to vector<8x32xf32>
    %21 = arith.addf %19, %20 : vector<8x32xf32>
    %c0_14 = arith.constant 0 : index
    %c0_15 = arith.constant 0 : index
    %22 = vector.load %arg14[%c0_14, %c0_15] : memref<8x32xf32, #tpu.memory_space<vmem>>, vector<8x32xf32>
    tpu.vector_store %arg14[%c0_14, %c0_15], %21 {strides = array<i32>} : memref<8x32xf32, #tpu.memory_space<vmem>>, vector<8x32xf32>,
    %c800 = arith.constant 800 : index
    %c0_16 = arith.constant 0 : index
    %23 = vector.load %arg6[%c800, %c0_16] : memref<832x32xbf16, #tpu.memory_space<vmem>>, vector<32x32xbf16>
    %c0_17 = arith.constant 0 : index
    %c0_18 = arith.constant 0 : index
    %c0_19 = arith.constant 0 : index
    %24 = vector.load %arg1[%c0_17, %c0_18, %c0_19] : memref<1x2x1xi32, #tpu.memory_space<vmem>>, vector<1x2x1xi32>
    %25 = vector.shape_cast %24 : vector<1x2x1xi32> to vector<2x1xi32>
    %c0_20 = arith.constant 0 : index
    %c0_21 = arith.constant 0 : index
    %26 = vector.load %arg11[%c0_20, %c0_21] : memref<2x32xf32, #tpu.memory_space<vmem>>, vector<2x32xf32>
    %c0_22 = arith.constant 0 : index
    %c0_23 = arith.constant 0 : index
    %27 = tpu.strided_load %arg14[%c0_22, %c0_23] {strides = array<i32: 4, 1>} : memref<8x32xf32, #tpu.memory_space<vmem>>, vector<2x32xf32>
    %28 = arith.truncf %26 : vector<2x32xf32> to vector<2x32xbf16>
    %cst_24 = arith.constant dense<0.000000e+00> : vector<2x32xf32>
    %29 = tpu.matmul %28, %23, %cst_24 {dimension_numbers = #tpu.dot_dimension_numbers<[1], [0], [0], [1], [0, 0, 1, 1], [], []>} : vector<2x32xbf16>, vector<32x32xbf16>, vector<2x32xf32> -> vector<2x32xf32>
    %30 = arith.addf %27, %29 : vector<2x32xf32>
    %31 = math.tanh %30 : vector<2x32xf32>
    %c0_i32_25 = arith.constant 0 : i32
    %32 = vector.broadcast %c0_i32_25 : i32 to vector<2x1xi32>
    %33 = arith.cmpi sgt, %25, %32 : vector<2x1xi32>
    %34 = vector.shape_cast %33 : vector<2x1xi1> to vector<2x1xi1>
    %35 = vector.broadcast %34 : vector<2x1xi1> to vector<2x32xi1>
    %36 = arith.select %35, %31, %26 : vector<2x32xi1>, vector<2x32xf32>
    %c1_26 = arith.constant 1 : index
    %c0_27 = arith.constant 0 : index
    %37 = tpu.strided_load %arg14[%c1_26, %c0_27] {strides = array<i32: 4, 1>} : memref<8x32xf32, #tpu.memory_space<vmem>>, vector<2x32xf32>
    %38 = arith.truncf %36 : vector<2x32xf32> to vector<2x32xbf16>
    %cst_28 = arith.constant dense<0.000000e+00> : vector<2x32xf32>
    %39 = tpu.matmul %38, %23, %cst_28 {dimension_numbers = #tpu.dot_dimension_numbers<[1], [0], [0], [1], [0, 0, 1, 1], [], []>} : vector<2x32xbf16>, vector<32x32xbf16>, vector<2x32xf32> -> vector<2x32xf32>
    %40 = arith.addf %37, %39 : vector<2x32xf32>
    %41 = math.tanh %40 : vector<2x32xf32>
    %c1_i32 = arith.constant 1 : i32
    %42 = vector.broadcast %c1_i32 : i32 to vector<2x1xi32>
    %43 = arith.cmpi sgt, %25, %42 : vector<2x1xi32>
    %44 = vector.shape_cast %43 : vector<2x1xi1> to vector<2x1xi1>
    %45 = vector.broadcast %44 : vector<2x1xi1> to vector<2x32xi1>
    %46 = arith.select %45, %41, %36 : vector<2x32xi1>, vector<2x32xf32>
    %c2 = arith.constant 2 : index
    %c0_29 = arith.constant 0 : index
    %47 = tpu.strided_load %arg14[%c2, %c0_29] {strides = array<i32: 4, 1>} : memref<8x32xf32, #tpu.memory_space<vmem>>, vector<2x32xf32>
    %48 = arith.truncf %46 : vector<2x32xf32> to vector<2x32xbf16>
    %cst_30 = arith.constant dense<0.000000e+00> : vector<2x32xf32>
    %49 = tpu.matmul %48, %23, %cst_30 {dimension_numbers = #tpu.dot_dimension_numbers<[1], [0], [0], [1], [0, 0, 1, 1], [], []>} : vector<2x32xbf16>, vector<32x32xbf16>, vector<2x32xf32> -> vector<2x32xf32>
    %50 = arith.addf %47, %49 : vector<2x32xf32>
    %51 = math.tanh %50 : vector<2x32xf32>
    %c2_i32 = arith.constant 2 : i32
    %52 = vector.broadcast %c2_i32 : i32 to vector<2x1xi32>
    %53 = arith.cmpi sgt, %25, %52 : vector<2x1xi32>
    %54 = vector.shape_cast %53 : vector<2x1xi1> to vector<2x1xi1>
    %55 = vector.broadcast %54 : vector<2x1xi1> to vector<2x32xi1>
    %56 = arith.select %55, %51, %46 : vector<2x32xi1>, vector<2x32xf32>
    %c3_31 = arith.constant 3 : index
    %c0_32 = arith.constant 0 : index
    %57 = tpu.strided_load %arg14[%c3_31, %c0_32] {strides = array<i32: 4, 1>} : memref<8x32xf32, #tpu.memory_space<vmem>>, vector<2x32xf32>
    %58 = arith.truncf %56 : vector<2x32xf32> to vector<2x32xbf16>
    %cst_33 = arith.constant dense<0.000000e+00> : vector<2x32xf32>
    %59 = tpu.matmul %58, %23, %cst_33 {dimension_numbers = #tpu.dot_dimension_numbers<[1], [0], [0], [1], [0, 0, 1, 1], [], []>} : vector<2x32xbf16>, vector<32x32xbf16>, vector<2x32xf32> -> vector<2x32xf32>
    %60 = arith.addf %57, %59 : vector<2x32xf32>
    %61 = math.tanh %60 : vector<2x32xf32>
    %c3_i32 = arith.constant 3 : i32
    %62 = vector.broadcast %c3_i32 : i32 to vector<2x1xi32>
    %63 = arith.cmpi sgt, %25, %62 : vector<2x1xi32>
    %64 = vector.shape_cast %63 : vector<2x1xi1> to vector<2x1xi1>
    %65 = vector.broadcast %64 : vector<2x1xi1> to vector<2x32xi1>
    %66 = arith.select %65, %61, %56 : vector<2x32xi1>, vector<2x32xf32>
    %c0_34 = arith.constant 0 : index
    %c0_35 = arith.constant 0 : index
    %67 = vector.load %arg11[%c0_34, %c0_35] : memref<2x32xf32, #tpu.memory_space<vmem>>, vector<2x32xf32>
    tpu.vector_store %arg11[%c0_34, %c0_35], %66 {strides = array<i32>} : memref<2x32xf32, #tpu.memory_space<vmem>>, vector<2x32xf32>,
    %68 = tpu.iota {dimensions = array<i32: 1>} : vector<2x16xi32>
    %c0_36 = arith.constant 0 : index
    %c0_37 = arith.constant 0 : index
    %c0_38 = arith.constant 0 : index
    %69 = vector.load %arg2[%c0_36, %c0_37, %c0_38] : memref<1x2x1xi32, #tpu.memory_space<vmem>>, vector<1x2x1xi32>
    %70 = vector.shape_cast %69 : vector<1x2x1xi32> to vector<2x1xi32>
    %71 = vector.broadcast %70 : vector<2x1xi32> to vector<2x16xi32>
    %72 = arith.cmpi eq, %68, %71 : vector<2x16xi32>
    %73 = arith.extui %72 : vector<2x16xi1> to vector<2x16xi32>
    %74 = arith.sitofp %73 : vector<2x16xi32> to vector<2x16xf32>
    %75 = arith.truncf %74 : vector<2x16xf32> to vector<2x16xbf16>
    %c0_39 = arith.constant 0 : index
    %c0_40 = arith.constant 0 : index
    %76 = vector.load %arg15[%c0_39, %c0_40] : memref<2x512xf32, #tpu.memory_space<vmem>>, vector<2x512xf32>
    %77 = arith.truncf %66 : vector<2x32xf32> to vector<2x32xbf16>
    %c0_41 = arith.constant 0 : index
    %c0_42 = arith.constant 0 : index
    %78 = vector.load %arg7[%c0_41, %c0_42] : memref<112x512xbf16, #tpu.memory_space<vmem>>, vector<32x512xbf16>
    %cst_43 = arith.constant dense<0.000000e+00> : vector<2x512xf32>
    %79 = tpu.matmul %77, %78, %cst_43 {dimension_numbers = #tpu.dot_dimension_numbers<[1], [0], [0], [1], [0, 0, 1, 1], [], []>} : vector<2x32xbf16>, vector<32x512xbf16>, vector<2x512xf32> -> vector<2x512xf32>
    %80 = arith.addf %76, %79 : vector<2x512xf32>
    %c96 = arith.constant 96 : index
    %c0_44 = arith.constant 0 : index
    %81 = vector.load %arg7[%c96, %c0_44] : memref<112x512xbf16, #tpu.memory_space<vmem>>, vector<16x512xbf16>
    %cst_45 = arith.constant dense<0.000000e+00> : vector<2x512xf32>
    %82 = tpu.matmul %75, %81, %cst_45 {dimension_numbers = #tpu.dot_dimension_numbers<[1], [0], [0], [1], [0, 0, 1, 1], [], []>} : vector<2x16xbf16>, vector<16x512xbf16>, vector<2x512xf32> -> vector<2x512xf32>
    %83 = arith.addf %80, %82 : vector<2x512xf32>
    %cst_46 = arith.constant 0.000000e+00 : f32
    %84 = vector.broadcast %cst_46 : f32 to vector<2x512xf32>
    %85 = arith.maximumf %83, %84 : vector<2x512xf32>
    %c0_47 = arith.constant 0 : index
    %c0_48 = arith.constant 0 : index
    %c0_49 = arith.constant 0 : index
    %86 = vector.load %arg12[%c0_47, %c0_48, %c0_49] : memref<1x2x512xf32, #tpu.memory_space<vmem>>, vector<1x2x512xf32>
    %87 = vector.shape_cast %86 : vector<1x2x512xf32> to vector<2x512xf32>
    %88 = vector.shape_cast %85 : vector<2x512xf32> to vector<1x2x512xf32>
    tpu.vector_store %arg12[%c0_47, %c0_48, %c0_49], %88 {strides = array<i32>} : memref<1x2x512xf32, #tpu.memory_space<vmem>>, vector<1x2x512xf32>,
    %89 = arith.truncf %85 : vector<2x512xf32> to vector<2x512xbf16>
    %c0_50 = arith.constant 0 : index
    %c0_51 = arith.constant 0 : index
    %90 = vector.load %arg8[%c0_50, %c0_51] : memref<512x256xbf16, #tpu.memory_space<vmem>>, vector<512x256xbf16>
    %cst_52 = arith.constant dense<0.000000e+00> : vector<2x256xf32>
    %91 = tpu.matmul %89, %90, %cst_52 {dimension_numbers = #tpu.dot_dimension_numbers<[1], [0], [0], [1], [0, 0, 1, 1], [], []>} : vector<2x512xbf16>, vector<512x256xbf16>, vector<2x256xf32> -> vector<2x256xf32>
    %92 = vector.broadcast %5 : vector<1x256xf32> to vector<2x256xf32>
    %93 = arith.addf %91, %92 : vector<2x256xf32>
    %94 = vector.extract_strided_slice %93 {offsets = [0, 0], sizes = [2, 128], strides = [1, 1]} : vector<2x256xf32> to vector<2x128xf32>
    %cst_53 = arith.constant dense<0xFF800000> : vector<2xf32>
    %95 = vector.multi_reduction <maximumf>, %94, %cst_53 [1] : vector<2x128xf32> to vector<2xf32>
    %96 = vector.shape_cast %95 : vector<2xf32> to vector<2x1xf32>
    %97 = vector.broadcast %96 : vector<2x1xf32> to vector<2x128xf32>
    %98 = arith.subf %94, %97 : vector<2x128xf32>
    %99 = math.exp %98 : vector<2x128xf32>
    %cst_54 = arith.constant dense<0.000000e+00> : vector<2xf32>
    %100 = vector.multi_reduction <add>, %99, %cst_54 [1] : vector<2x128xf32> to vector<2xf32>
    %101 = vector.shape_cast %100 : vector<2xf32> to vector<2x1xf32>
    %102 = math.log %101 : vector<2x1xf32>
    %103 = arith.addf %102, %96 : vector<2x1xf32>
    %104 = vector.broadcast %103 : vector<2x1xf32> to vector<2x128xf32>
    %105 = arith.subf %94, %104 : vector<2x128xf32>
    %c0_55 = arith.constant 0 : index
    %c0_56 = arith.constant 0 : index
    %c0_57 = arith.constant 0 : index
    %106 = vector.load %arg13[%c0_55, %c0_56, %c0_57] : memref<1x2x256xf32, #tpu.memory_space<vmem>>, vector<1x2x128xf32>
    %107 = vector.shape_cast %106 : vector<1x2x128xf32> to vector<2x128xf32>
    %108 = vector.shape_cast %105 : vector<2x128xf32> to vector<1x2x128xf32>
    tpu.vector_store %arg13[%c0_55, %c0_56, %c0_57], %108 {strides = array<i32>} : memref<1x2x256xf32, #tpu.memory_space<vmem>>, vector<1x2x128xf32>,
    %109 = vector.extract_strided_slice %93 {offsets = [0, 128], sizes = [2, 128], strides = [1, 1]} : vector<2x256xf32> to vector<2x128xf32>
    %cst_58 = arith.constant dense<0xFF800000> : vector<2xf32>
    %110 = vector.multi_reduction <maximumf>, %109, %cst_58 [1] : vector<2x128xf32> to vector<2xf32>
    %111 = vector.shape_cast %110 : vector<2xf32> to vector<2x1xf32>
    %112 = vector.broadcast %111 : vector<2x1xf32> to vector<2x128xf32>
    %113 = arith.subf %109, %112 : vector<2x128xf32>
    %114 = math.exp %113 : vector<2x128xf32>
    %cst_59 = arith.constant dense<0.000000e+00> : vector<2xf32>
    %115 = vector.multi_reduction <add>, %114, %cst_59 [1] : vector<2x128xf32> to vector<2xf32>
    %116 = vector.shape_cast %115 : vector<2xf32> to vector<2x1xf32>
    %117 = math.log %116 : vector<2x1xf32>
    %118 = arith.addf %117, %111 : vector<2x1xf32>
    %119 = vector.broadcast %118 : vector<2x1xf32> to vector<2x128xf32>
    %120 = arith.subf %109, %119 : vector<2x128xf32>
    %c0_60 = arith.constant 0 : index
    %c0_61 = arith.constant 0 : index
    %c128 = arith.constant 128 : index
    %121 = vector.load %arg13[%c0_60, %c0_61, %c128] : memref<1x2x256xf32, #tpu.memory_space<vmem>>, vector<1x2x128xf32>
    %122 = vector.shape_cast %121 : vector<1x2x128xf32> to vector<2x128xf32>
    %123 = vector.shape_cast %120 : vector<2x128xf32> to vector<1x2x128xf32>
    tpu.vector_store %arg13[%c0_60, %c0_61, %c128], %123 {strides = array<i32>} : memref<1x2x256xf32, #tpu.memory_space<vmem>>, vector<1x2x128xf32>,
    return
  }
  func.func @transform_0(%arg0: i32) -> (i32, i32, i32) {
    %c0_i32 = arith.constant 0 : i32
    %c0_i32_0 = arith.constant 0 : i32
    %c0_i32_1 = arith.constant 0 : i32
    return %arg0, %c0_i32, %c0_i32_0 : i32, i32, i32
  }
  func.func @transform_1(%arg0: i32) -> (i32, i32, i32) {
    %c0_i32 = arith.constant 0 : i32
    %c0_i32_0 = arith.constant 0 : i32
    %c0_i32_1 = arith.constant 0 : i32
    return %arg0, %c0_i32, %c0_i32_0 : i32, i32, i32
  }
  func.func @transform_2(%arg0: i32) -> (i32, i32, i32) {
    %c0_i32 = arith.constant 0 : i32
    %c0_i32_0 = arith.constant 0 : i32
    %c0_i32_1 = arith.constant 0 : i32
    return %arg0, %c0_i32, %c0_i32_0 : i32, i32, i32
  }
  func.func @transform_3(%arg0: i32) -> (i32, i32) {
    %c0_i32 = arith.constant 0 : i32
    %c0_i32_0 = arith.constant 0 : i32
    %c0_i32_1 = arith.constant 0 : i32
    return %c0_i32, %c0_i32_0 : i32, i32
  }
  func.func @transform_4(%arg0: i32) -> (i32, i32) {
    %c0_i32 = arith.constant 0 : i32
    %c0_i32_0 = arith.constant 0 : i32
    %c0_i32_1 = arith.constant 0 : i32
    return %c0_i32, %c0_i32_0 : i32, i32
  }
  func.func @transform_5(%arg0: i32) -> (i32, i32) {
    %c0_i32 = arith.constant 0 : i32
    %c0_i32_0 = arith.constant 0 : i32
    %c0_i32_1 = arith.constant 0 : i32
    return %c0_i32, %c0_i32_0 : i32, i32
  }
  func.func @transform_6(%arg0: i32) -> (i32, i32) {
    %c0_i32 = arith.constant 0 : i32
    %c0_i32_0 = arith.constant 0 : i32
    %c0_i32_1 = arith.constant 0 : i32
    return %c0_i32, %c0_i32_0 : i32, i32
  }
  func.func @transform_7(%arg0: i32) -> (i32, i32) {
    %c0_i32 = arith.constant 0 : i32
    %c0_i32_0 = arith.constant 0 : i32
    %c0_i32_1 = arith.constant 0 : i32
    return %c0_i32, %c0_i32_0 : i32, i32
  }
  func.func @transform_8(%arg0: i32) -> (i32, i32) {
    %c0_i32 = arith.constant 0 : i32
    %c0_i32_0 = arith.constant 0 : i32
    %c0_i32_1 = arith.constant 0 : i32
    return %c0_i32, %c0_i32_0 : i32, i32
  }
  func.func @transform_9(%arg0: i32) -> (i32, i32, i32) {
    %c0_i32 = arith.constant 0 : i32
    %c0_i32_0 = arith.constant 0 : i32
    %c0_i32_1 = arith.constant 0 : i32
    return %arg0, %c0_i32, %c0_i32_0 : i32, i32, i32
  }
  func.func @transform_10(%arg0: i32) -> (i32, i32) {
    %c0_i32 = arith.constant 0 : i32
    %c0_i32_0 = arith.constant 0 : i32
    %c0_i32_1 = arith.constant 0 : i32
    return %c0_i32, %c0_i32_0 : i32, i32
  }
  func.func @transform_11(%arg0: i32) -> (i32, i32, i32) {
    %c0_i32 = arith.constant 0 : i32
    %c0_i32_0 = arith.constant 0 : i32
    %c0_i32_1 = arith.constant 0 : i32
    return %arg0, %c0_i32, %c0_i32_0 : i32, i32, i32
  }
  func.func @transform_12(%arg0: i32) -> (i32, i32, i32) {
    %c0_i32 = arith.constant 0 : i32
    %c0_i32_0 = arith.constant 0 : i32
    %c0_i32_1 = arith.constant 0 : i32
    return %arg0, %c0_i32, %c0_i32_0 : i32, i32, i32
  }
}

</mosaic_0001>

<llo_original>
// kernel: forward.1
$region0: #{forward.1}
  #allocation0 [shape = 'u32[]', space=smem, size = 0x4, offset = 0x4, fixed_abs, tag = 'smem constant byte address 0x4 - core index']
  #allocation1 [shape = 'u32[144,128]{1,0:T(1,128)}', space=vmem, size = 0x12000, scoped, tag = 'internal scratch']
  #allocation2 [shape = 'f32[8,32]{1,0:T(8,128)}', space=vmem, size = 0x1000, scoped, tag = 'scratch operand']
  #allocation3 [shape = 'f32[2,512]{1,0:T(2,128)}', space=vmem, size = 0x1000, scoped, tag = 'scratch operand']
  %s0 = inlined_call_operand.vmem [shape: s32[1,2,1], index: 0, kind: input, shape index: {}]
  %s1 = inlined_call_operand.vmem [shape: s32[1,2,1], index: 1, kind: input, shape index: {}]
  %s2 = inlined_call_operand.vmem [shape: f32[1,8,768], index: 2, kind: input, shape index: {}]
  %s3 = inlined_call_operand.vmem [shape: f32[2,32], index: 3, kind: input, shape index: {}]
  %s4 = inlined_call_operand.vmem [shape: f32[2,64], index: 4, kind: input, shape index: {}]
  %s5 = inlined_call_operand.vmem [shape: bf16[832,32], index: 5, kind: input, shape index: {}]
  %s6 = inlined_call_operand.vmem [shape: bf16[112,512], index: 6, kind: input, shape index: {}]
  %s7 = inlined_call_operand.vmem [shape: bf16[512,256], index: 7, kind: input, shape index: {}]
  %s8 = inlined_call_operand.vmem [shape: f32[4,512], index: 8, kind: input, shape index: {}]
  %s9 = inlined_call_operand.hbm [shape: f32[1,8,32], index: 9, kind: output, shape index: {0}]
  %s10 = inlined_call_operand.hbm [shape: f32[2,32], index: 10, kind: output, shape index: {1}]
  %s11 = inlined_call_operand.hbm [shape: f32[1,2,512], index: 11, kind: output, shape index: {2}]
  %s12 = inlined_call_operand.vmem [shape: f32[1,2,256], index: 12, kind: output, shape index: {3}]
  %13 = xla_tuple %s9, %s10, %s11, %s12
  %s14 = sld [smem:[#allocation0]]
  $region74: #{forward.1} parent=0
    _
  %s16 = ssub.s32 1, %s14
  %s17 = scalar_select 0, %s16, %s14
  $region1: #{forward.1} parent=0
    #allocation4 [shape = 'u8[4096]{0}', space=vmem, size = 0x1000, scoped, tag = 'output window, operand 0, single buffered']
    #allocation5 [shape = 's32[1]{0}', space=sflag, size = 0x4, scoped, tag = 'scoped memory for forward.1']
    #allocation6 [shape = 'u8[1024]{0}', space=vmem, size = 0x400, scoped, tag = 'output window, operand 1, single buffered']
    #allocation7 [shape = 's32[1]{0}', space=sflag, size = 0x4, scoped, tag = 'scoped memory for forward.1']
    #allocation8 [shape = 'u8[4096]{0}', space=vmem, size = 0x1000, scoped, tag = 'output window, operand 2, single buffered']
    %18 = vsyncpa [#allocation5], 0
    %19 = vsyncpa [#allocation7], 0
    // Predicated region
    $region2: #{forward.1} parent=1 // pred_check
      _
    $region3: #{forward.1} parent=1 // pred_check_branch
      %21 = sbr.rel (0) target = $region5
    $region4: #{forward.1} parent=1 // pred_region
      _
    $region5: #{forward.1} parent=1 // pred_fallthru
      _
    // Predicated region
    $region6: #{forward.1} parent=1 // pred_check
      _
    $region7: #{forward.1} parent=1 // pred_check_branch
      %23 = sbr.rel (0) target = $region9
    $region8: #{forward.1} parent=1 // pred_region
      _
    $region9: #{forward.1} parent=1 // pred_fallthru
      _
    // Predicated region
    $region10: #{forward.1} parent=1 // pred_check
      _
    $region11: #{forward.1} parent=1 // pred_check_branch
      %25 = sbr.rel (0) target = $region13
    $region12: #{forward.1} parent=1 // pred_region
      _
    $region13: #{forward.1} parent=1 // pred_fallthru
      _
    // Predicated region
    $region14: #{forward.1} parent=1 // pred_check
      _
    $region15: #{forward.1} parent=1 // pred_check_branch
      %27 = sbr.rel (0) target = $region17
    $region16: #{forward.1} parent=1 // pred_region
      _
    $region17: #{forward.1} parent=1 // pred_fallthru
      _
    // Predicated region
    $region18: #{forward.1} parent=1 // pred_check
      _
    $region19: #{forward.1} parent=1 // pred_check_branch
      %29 = sbr.rel (0) target = $region21
    $region20: #{forward.1} parent=1 // pred_region
      _
    $region21: #{forward.1} parent=1 // pred_fallthru
      _
    // Predicated region
    $region22: #{forward.1} parent=1 // pred_check
      _
    $region23: #{forward.1} parent=1 // pred_check_branch
      %31 = sbr.rel (0) target = $region25
    $region24: #{forward.1} parent=1 // pred_region
      _
    $region25: #{forward.1} parent=1 // pred_fallthru
      _
    // Predicated region
    $region26: #{forward.1} parent=1 // pred_check
      _
    $region27: #{forward.1} parent=1 // pred_check_branch
      %33 = sbr.rel (0) target = $region29
    $region28: #{forward.1} parent=1 // pred_region
      _
    $region29: #{forward.1} parent=1 // pred_fallthru
      _
    // Predicated region
    $region30: #{forward.1} parent=1 // pred_check
      _
    $region31: #{forward.1} parent=1 // pred_check_branch
      %35 = sbr.rel (0) target = $region33
    $region32: #{forward.1} parent=1 // pred_region
      _
    $region33: #{forward.1} parent=1 // pred_fallthru
      _
    // Predicated region
    $region34: #{forward.1} parent=1 // pred_check
      _
    $region35: #{forward.1} parent=1 // pred_check_branch
      %37 = sbr.rel (0) target = $region37
    $region36: #{forward.1} parent=1 // pred_region
      _
    $region37: #{forward.1} parent=1 // pred_fallthru
      _
    %p39 = scmp.eq.s32.totalorder 0, 0
    // Predicated region
    $region38: #{forward.1} parent=1 // pred_check
      %p40 = pneg %p39
    $region39: #{forward.1} parent=1 // pred_check_branch
      %42 = sbr.rel (%p40) target = $region41
    $region40: #{forward.1} parent=1 // pred_region
      %v43 = vld [vmem:[%s3] sm:$0x3]
      %vm44 = vcmask 254976
      %45 = vst.msk [vmem:[#allocation6] sm:$0x3] %vm44, %v43
      %v46 = vld [vmem:[%s4] sm:$0x3]
      %v47 = vpack.c.bf16 %v46, %v46
      %v48 = vld [vmem:[%s6 + $0x40] sm:$0xff]
      %v49 = vld [vmem:[%s6 + $0x48] sm:$0xff]
      %v50 = vld [vmem:[%s6 + $0x50] sm:$0xff]
      %v51 = vld [vmem:[%s6 + $0x58] sm:$0xff]
      %v52 = vld [vmem:[%s6 + $0x60] sm:$0xff]
      %v53 = vld [vmem:[%s6 + $0x68] sm:$0xff]
      %v54 = vld [vmem:[%s6 + $0x70] sm:$0xff]
      %v55 = vld [vmem:[%s6 + $0x78] sm:$0xff]
      %v56 = vld [vmem:[%s6 + $0x80] sm:$0xff]
      %v57 = vld [vmem:[%s6 + $0x88] sm:$0xff]
      %v58 = vld [vmem:[%s6 + $0x90] sm:$0xff]
      %v59 = vld [vmem:[%s6 + $0x98] sm:$0xff]
      %v60 = vld [vmem:[%s6 + $0xa0] sm:$0xff]
      %v61 = vld [vmem:[%s6 + $0xa8] sm:$0xff]
      %v62 = vld [vmem:[%s6 + $0xb0] sm:$0xff]
      %v63 = vld [vmem:[%s6 + $0xb8] sm:$0xff]
      %s64 = scalar_lea.vmem %s8, 2
      %v65 = vld [vmem:[%s64] ss:$4 sm:$0xf]
      %v67 = vlaneseq
      %v68 = vshrl.u32 %v67, 7
      %v69 = vsub.s32 0, %v68
      %v70 = vrot.slane %v65, %v69
      %v71 = vlaneseq
      %v72 = vshrl.u32 %v71, 7
      %v73 = vsub.s32 1, %v72
      %v74 = vrot.slane %v65, %v73
      %v75 = vlaneseq
      %v76 = vshrl.u32 %v75, 7
      %v77 = vsub.s32 2, %v76
      %v78 = vrot.slane %v65, %v77
      %v79 = vlaneseq
      %v80 = vshrl.u32 %v79, 7
      %v81 = vsub.s32 3, %v80
      %v82 = vrot.slane %v65, %v81
      %v103 = vunpack.c.l.b16 %v48
      %v104 = vunpack.c.h.b16 %v48
      %v105 = vunpack.c.l.b16 %v49
      %v106 = vunpack.c.h.b16 %v49
      %v107 = vunpack.c.l.b16 %v50
      %v108 = vunpack.c.h.b16 %v50
      %v109 = vunpack.c.l.b16 %v51
      %v110 = vunpack.c.h.b16 %v51
      %v111 = vunpack.c.l.b16 %v52
      %v112 = vunpack.c.h.b16 %v52
      %v113 = vunpack.c.l.b16 %v53
      %v114 = vunpack.c.h.b16 %v53
      %v115 = vunpack.c.l.b16 %v54
      %v116 = vunpack.c.h.b16 %v54
      %v117 = vunpack.c.l.b16 %v55
      %v118 = vunpack.c.h.b16 %v55
      %v119 = vunpack.c.l.b16 %v56
      %v120 = vunpack.c.h.b16 %v56
      %v121 = vunpack.c.l.b16 %v57
      %v122 = vunpack.c.h.b16 %v57
      %v123 = vunpack.c.l.b16 %v58
      %v124 = vunpack.c.h.b16 %v58
      %v125 = vunpack.c.l.b16 %v59
      %v126 = vunpack.c.h.b16 %v59
      %v127 = vunpack.c.l.b16 %v60
      %v128 = vunpack.c.h.b16 %v60
      %v129 = vunpack.c.l.b16 %v61
      %v130 = vunpack.c.h.b16 %v61
      %v131 = vunpack.c.l.b16 %v62
      %v132 = vunpack.c.h.b16 %v62
      %v133 = vunpack.c.l.b16 %v63
      %v134 = vunpack.c.h.b16 %v63
      %v135 = vpack.c.b16 %v107, %v103
      %v136 = vpack.c.b16 %v108, %v104
      %v137 = vpack.c.b16 %v109, %v105
      %v138 = vpack.c.b16 %v110, %v106
      %v139 = vpack.c.b16 %v115, %v111
      %v140 = vpack.c.b16 %v116, %v112
      %v141 = vpack.c.b16 %v117, %v113
      %v142 = vpack.c.b16 %v118, %v114
      %v143 = vpack.c.b16 %v123, %v119
      %v144 = vpack.c.b16 %v124, %v120
      %v145 = vpack.c.b16 %v125, %v121
      %v146 = vpack.c.b16 %v126, %v122
      %v147 = vpack.c.b16 %v131, %v127
      %v148 = vpack.c.b16 %v132, %v128
      %v149 = vpack.c.b16 %v133, %v129
      %v150 = vpack.c.b16 %v134, %v130
      %vm167 = vcmask 523264
      %v169 = vsel %vm167, %v47, 0
      %171 = vmatprep.subr.bf16.mxu0 %v136
      %172 = vmatpush1.bf16.msra.mxu0 %v135
      %173 = vmatprep.subr.bf16.mxu0 %v140
      %174 = vmatpush1.bf16.msra.mxu0 %v139
      %175 = vmatprep.subr.bf16.mxu0 %v144
      %176 = vmatpush1.bf16.msra.mxu0 %v143
      %177 = vmatprep.subr.bf16.mxu0 %v148
      %178 = vmatpush1.bf16.msra.mxu0 %v147
      %179 = vmatprep.subr.bf16.mxu0 0
      %180 = vmatpush1.bf16.msra.mxu0 0
      %181 = vmatprep.subr.bf16.mxu0 0
      %182 = vmatpush1.bf16.msra.mxu0 0
      %183 = vmatprep.subr.bf16.mxu0 0
      %184 = vmatpush1.bf16.msra.mxu0 0
      %185 = vmatprep.subr.bf16.mxu0 0
      %186 = vmatpush1.bf16.msra.mxu0 0
      %187 = vmatprep.subr.bf16.mxu0 0
      %188 = vmatpush1.bf16.msra.mxu0 0
      %189 = vmatprep.subr.bf16.mxu0 0
      %190 = vmatpush1.bf16.msra.mxu0 0
      %191 = vmatprep.subr.bf16.mxu0 0
      %192 = vmatpush1.bf16.msra.mxu0 0
      %193 = vmatprep.subr.bf16.mxu0 0
      %194 = vmatpush1.bf16.msra.mxu0 0
      %195 = vmatprep.subr.bf16.mxu0 0
      %196 = vmatpush1.bf16.msra.mxu0 0
      %197 = vmatprep.subr.bf16.mxu0 0
      %198 = vmatpush1.bf16.msra.mxu0 0
      %199 = vmatprep.subr.bf16.mxu0 0
      %200 = vmatpush1.bf16.msra.mxu0 0
      %201 = vmatprep.subr.bf16.mxu0 0
      %202 = vmatpush1.bf16.msra.mxu0 0
      %203 = vmatprep.mubr.bf16.mxu0 0
      %204 = vmatmul.mubr.bf16.gmra.mrb[0].mxu0 %v169
      %v205 = vpop.f32.mrb[0].mxu0
      %v206 = vadd.f32 %v70, %v205
      %v207 = vpop.f32.mrb[0].mxu0
      %v208 = vadd.f32 %v74, %v207
      %v209 = vpop.f32.mrb[0].mxu0
      %v210 = vpop.f32.mrb[0].mxu0
      %211 = vdwg.mxu0
      %212 = vmatprep.subr.bf16.mxu0 %v138
      %213 = vmatpush1.bf16.msra.mxu0 %v137
      %214 = vmatprep.subr.bf16.mxu0 %v142
      %215 = vmatpush1.bf16.msra.mxu0 %v141
      %216 = vmatprep.subr.bf16.mxu0 %v146
      %217 = vmatpush1.bf16.msra.mxu0 %v145
      %218 = vmatprep.subr.bf16.mxu0 %v150
      %219 = vmatpush1.bf16.msra.mxu0 %v149
      %220 = vmatprep.subr.bf16.mxu0 0
      %221 = vmatpush1.bf16.msra.mxu0 0
      %222 = vmatprep.subr.bf16.mxu0 0
      %223 = vmatpush1.bf16.msra.mxu0 0
      %224 = vmatprep.subr.bf16.mxu0 0
      %225 = vmatpush1.bf16.msra.mxu0 0
      %226 = vmatprep.subr.bf16.mxu0 0
      %227 = vmatpush1.bf16.msra.mxu0 0
      %228 = vmatprep.subr.bf16.mxu0 0
      %229 = vmatpush1.bf16.msra.mxu0 0
      %230 = vmatprep.subr.bf16.mxu0 0
      %231 = vmatpush1.bf16.msra.mxu0 0
      %232 = vmatprep.subr.bf16.mxu0 0
      %233 = vmatpush1.bf16.msra.mxu0 0
      %234 = vmatprep.subr.bf16.mxu0 0
      %235 = vmatpush1.bf16.msra.mxu0 0
      %236 = vmatprep.subr.bf16.mxu0 0
      %237 = vmatpush1.bf16.msra.mxu0 0
      %238 = vmatprep.subr.bf16.mxu0 0
      %239 = vmatpush1.bf16.msra.mxu0 0
      %240 = vmatprep.subr.bf16.mxu0 0
      %241 = vmatpush1.bf16.msra.mxu0 0
      %242 = vmatprep.subr.bf16.mxu0 0
      %243 = vmatpush1.bf16.msra.mxu0 0
      %244 = vmatprep.mubr.bf16.mxu0 0
      %245 = vmatmul.mubr.bf16.gmra.mrb[0].mxu0 %v169
      %v246 = vpop.f32.mrb[0].mxu0
      %v247 = vadd.f32 %v78, %v246
      %v248 = vpop.f32.mrb[0].mxu0
      %v249 = vadd.f32 %v82, %v248
      %v250 = vpop.f32.mrb[0].mxu0
      %v251 = vpop.f32.mrb[0].mxu0
      %252 = vdwg.mxu0
      %v257 = vcombine.low %v206, %v208
      %v258 = vcombine.low %v247, %v249
      %v260 = vunpack.c.l.s4 1983009808
      %v261 = vunpack.c.0.s8 %v260
      %v262 = vlaneseq
      %v263 = vshrl.u32 %v262, 7
      %v264 = vsub.s32 %v261, %v263
      %v265 = vrot.slane %v257, %v264
      %v267 = vunpack.c.l.s4 1983009808
      %v268 = vunpack.c.0.s8 %v267
      %v269 = vlaneseq
      %v270 = vshrl.u32 %v269, 7
      %v271 = vsub.s32 %v268, %v270
      %v272 = vrot.slane %v258, %v271
      %v273 = vcombine.low %v265, %v272
      %275 = vst [vmem:[#allocation3] sm:$0xff] %v273
    $region41: #{forward.1} parent=1 // pred_fallthru
      _
    %v276 = vld [vmem:[%s8] sm:$0x1]
    %v277 = vld [vmem:[%s8 + $0x1] sm:$0x1]
    %s278 = scalar_lea.vmem %s8, 3
    %v279 = vld [vmem:[%s278] ss:$4 sm:$0x3]
    %v280 = vld [vmem:[%s2] sm:$0xff]
    %v281 = vld [vmem:[%s2 + $0x8] sm:$0xff]
    %v282 = vld [vmem:[%s2 + $0x10] sm:$0xff]
    %v283 = vld [vmem:[%s2 + $0x18] sm:$0xff]
    %v284 = vld [vmem:[%s2 + $0x20] sm:$0xff]
    %v285 = vld [vmem:[%s2 + $0x28] sm:$0xff]
    %v286 = vpack.c.bf16 %v280, %v280
    %v287 = vpack.c.bf16 %v281, %v281
    %v288 = vpack.c.bf16 %v282, %v282
    %v289 = vpack.c.bf16 %v283, %v283
    %v290 = vpack.c.bf16 %v284, %v284
    %v291 = vpack.c.bf16 %v285, %v285
    %v292 = vld [vmem:[%s5] sm:$0xf]
    %v293 = vld [vmem:[%s5 + $0x4] sm:$0xf]
    %v294 = vld [vmem:[%s5 + $0x8] sm:$0xf]
    %v295 = vld [vmem:[%s5 + $0xc] sm:$0xf]
    %v296 = vld [vmem:[%s5 + $0x10] sm:$0xf]
    %v297 = vld [vmem:[%s5 + $0x14] sm:$0xf]
    %v298 = vld [vmem:[%s5 + $0x18] sm:$0xf]
    %v299 = vld [vmem:[%s5 + $0x1c] sm:$0xf]
    %v300 = vld [vmem:[%s5 + $0x20] sm:$0xf]
    %v301 = vld [vmem:[%s5 + $0x24] sm:$0xf]
    %v302 = vld [vmem:[%s5 + $0x28] sm:$0xf]
    %v303 = vld [vmem:[%s5 + $0x2c] sm:$0xf]
    %v304 = vld [vmem:[%s5 + $0x30] sm:$0xf]
    %v305 = vld [vmem:[%s5 + $0x34] sm:$0xf]
    %v306 = vld [vmem:[%s5 + $0x38] sm:$0xf]
    %v307 = vld [vmem:[%s5 + $0x3c] sm:$0xf]
    %v308 = vld [vmem:[%s5 + $0x40] sm:$0xf]
    %v309 = vld [vmem:[%s5 + $0x44] sm:$0xf]
    %v310 = vld [vmem:[%s5 + $0x48] sm:$0xf]
    %v311 = vld [vmem:[%s5 + $0x4c] sm:$0xf]
    %v312 = vld [vmem:[%s5 + $0x50] sm:$0xf]
    %v313 = vld [vmem:[%s5 + $0x54] sm:$0xf]
    %v314 = vld [vmem:[%s5 + $0x58] sm:$0xf]
    %v315 = vld [vmem:[%s5 + $0x5c] sm:$0xf]
    %v316 = vld [vmem:[%s5 + $0x60] sm:$0xf]
    %v317 = vld [vmem:[%s5 + $0x64] sm:$0xf]
    %v318 = vld [vmem:[%s5 + $0x68] sm:$0xf]
    %v319 = vld [vmem:[%s5 + $0x6c] sm:$0xf]
    %v320 = vld [vmem:[%s5 + $0x70] sm:$0xf]
    %v321 = vld [vmem:[%s5 + $0x74] sm:$0xf]
    %v322 = vld [vmem:[%s5 + $0x78] sm:$0xf]
    %v323 = vld [vmem:[%s5 + $0x7c] sm:$0xf]
    %v324 = vld [vmem:[%s5 + $0x80] sm:$0xf]
    %v325 = vld [vmem:[%s5 + $0x84] sm:$0xf]
    %v326 = vld [vmem:[%s5 + $0x88] sm:$0xf]
    %v327 = vld [vmem:[%s5 + $0x8c] sm:$0xf]
    %v328 = vld [vmem:[%s5 + $0x90] sm:$0xf]
    %v329 = vld [vmem:[%s5 + $0x94] sm:$0xf]
    %v330 = vld [vmem:[%s5 + $0x98] sm:$0xf]
    %v331 = vld [vmem:[%s5 + $0x9c] sm:$0xf]
    %v332 = vld [vmem:[%s5 + $0xa0] sm:$0xf]
    %v333 = vld [vmem:[%s5 + $0xa4] sm:$0xf]
    %v334 = vld [vmem:[%s5 + $0xa8] sm:$0xf]
    %v335 = vld [vmem:[%s5 + $0xac] sm:$0xf]
    %v336 = vld [vmem:[%s5 + $0xb0] sm:$0xf]
    %v337 = vld [vmem:[%s5 + $0xb4] sm:$0xf]
    %v338 = vld [vmem:[%s5 + $0xb8] sm:$0xf]
    %v339 = vld [vmem:[%s5 + $0xbc] sm:$0xf]
    %v340 = vld [vmem:[%s5 + $0xc0] sm:$0xf]
    %v341 = vld [vmem:[%s5 + $0xc4] sm:$0xf]
    %v342 = vld [vmem:[%s5 + $0xc8] sm:$0xf]
    %v343 = vld [vmem:[%s5 + $0xcc] sm:$0xf]
    %v344 = vld [vmem:[%s5 + $0xd0] sm:$0xf]
    %v345 = vld [vmem:[%s5 + $0xd4] sm:$0xf]
    %v346 = vld [vmem:[%s5 + $0xd8] sm:$0xf]
    %v347 = vld [vmem:[%s5 + $0xdc] sm:$0xf]
    %v348 = vld [vmem:[%s5 + $0xe0] sm:$0xf]
    %v349 = vld [vmem:[%s5 + $0xe4] sm:$0xf]
    %v350 = vld [vmem:[%s5 + $0xe8] sm:$0xf]
    %v351 = vld [vmem:[%s5 + $0xec] sm:$0xf]
    %v352 = vld [vmem:[%s5 + $0xf0] sm:$0xf]
    %v353 = vld [vmem:[%s5 + $0xf4] sm:$0xf]
    %v354 = vld [vmem:[%s5 + $0xf8] sm:$0xf]
    %v355 = vld [vmem:[%s5 + $0xfc] sm:$0xf]
    %v356 = vld [vmem:[%s5 + $0x100] sm:$0xf]
    %v357 = vld [vmem:[%s5 + $0x104] sm:$0xf]
    %v358 = vld [vmem:[%s5 + $0x108] sm:$0xf]
    %v359 = vld [vmem:[%s5 + $0x10c] sm:$0xf]
    %v360 = vld [vmem:[%s5 + $0x110] sm:$0xf]
    %v361 = vld [vmem:[%s5 + $0x114] sm:$0xf]
    %v362 = vld [vmem:[%s5 + $0x118] sm:$0xf]
    %v363 = vld [vmem:[%s5 + $0x11c] sm:$0xf]
    %v364 = vld [vmem:[%s5 + $0x120] sm:$0xf]
    %v365 = vld [vmem:[%s5 + $0x124] sm:$0xf]
    %v366 = vld [vmem:[%s5 + $0x128] sm:$0xf]
    %v367 = vld [vmem:[%s5 + $0x12c] sm:$0xf]
    %v368 = vld [vmem:[%s5 + $0x130] sm:$0xf]
    %v369 = vld [vmem:[%s5 + $0x134] sm:$0xf]
    %v370 = vld [vmem:[%s5 + $0x138] sm:$0xf]
    %v371 = vld [vmem:[%s5 + $0x13c] sm:$0xf]
    %v372 = vld [vmem:[%s5 + $0x140] sm:$0xf]
    %v373 = vld [vmem:[%s5 + $0x144] sm:$0xf]
    %v374 = vld [vmem:[%s5 + $0x148] sm:$0xf]
    %v375 = vld [vmem:[%s5 + $0x14c] sm:$0xf]
    %v376 = vld [vmem:[%s5 + $0x150] sm:$0xf]
    %v377 = vld [vmem:[%s5 + $0x154] sm:$0xf]
    %v378 = vld [vmem:[%s5 + $0x158] sm:$0xf]
    %v379 = vld [vmem:[%s5 + $0x15c] sm:$0xf]
    %v380 = vld [vmem:[%s5 + $0x160] sm:$0xf]
    %v381 = vld [vmem:[%s5 + $0x164] sm:$0xf]
    %v382 = vld [vmem:[%s5 + $0x168] sm:$0xf]
    %v383 = vld [vmem:[%s5 + $0x16c] sm:$0xf]
    %v384 = vld [vmem:[%s5 + $0x170] sm:$0xf]
    %v385 = vld [vmem:[%s5 + $0x174] sm:$0xf]
    %v386 = vld [vmem:[%s5 + $0x178] sm:$0xf]
    %v387 = vld [vmem:[%s5 + $0x17c] sm:$0xf]
    %v388 = vlaneseq
    %v389 = vshrl.u32 %v388, 7
    %v390 = vsub.s32 0, %v389
    %v391 = vrot.slane %v276, %v390
    %v488 = vunpack.c.l.b16 %v292
    %v489 = vunpack.c.l.b16 %v293
    %v490 = vunpack.c.l.b16 %v294
    %v491 = vunpack.c.l.b16 %v295
    %v492 = vunpack.c.l.b16 %v296
    %v493 = vunpack.c.l.b16 %v297
    %v494 = vunpack.c.l.b16 %v298
    %v495 = vunpack.c.l.b16 %v299
    %v496 = vunpack.c.l.b16 %v300
    %v497 = vunpack.c.l.b16 %v301
    %v498 = vunpack.c.l.b16 %v302
    %v499 = vunpack.c.l.b16 %v303
    %v500 = vunpack.c.l.b16 %v304
    %v501 = vunpack.c.l.b16 %v305
    %v502 = vunpack.c.l.b16 %v306
    %v503 = vunpack.c.l.b16 %v307
    %v504 = vunpack.c.l.b16 %v308
    %v505 = vunpack.c.l.b16 %v309
    %v506 = vunpack.c.l.b16 %v310
    %v507 = vunpack.c.l.b16 %v311
    %v508 = vunpack.c.l.b16 %v312
    %v509 = vunpack.c.l.b16 %v313
    %v510 = vunpack.c.l.b16 %v314
    %v511 = vunpack.c.l.b16 %v315
    %v512 = vunpack.c.l.b16 %v316
    %v513 = vunpack.c.l.b16 %v317
    %v514 = vunpack.c.l.b16 %v318
    %v515 = vunpack.c.l.b16 %v319
    %v516 = vunpack.c.l.b16 %v320
    %v517 = vunpack.c.l.b16 %v321
    %v518 = vunpack.c.l.b16 %v322
    %v519 = vunpack.c.l.b16 %v323
    %v520 = vunpack.c.l.b16 %v324
    %v521 = vunpack.c.l.b16 %v325
    %v522 = vunpack.c.l.b16 %v326
    %v523 = vunpack.c.l.b16 %v327
    %v524 = vunpack.c.l.b16 %v328
    %v525 = vunpack.c.l.b16 %v329
    %v526 = vunpack.c.l.b16 %v330
    %v527 = vunpack.c.l.b16 %v331
    %v528 = vunpack.c.l.b16 %v332
    %v529 = vunpack.c.l.b16 %v333
    %v530 = vunpack.c.l.b16 %v334
    %v531 = vunpack.c.l.b16 %v335
    %v532 = vunpack.c.l.b16 %v336
    %v533 = vunpack.c.l.b16 %v337
    %v534 = vunpack.c.l.b16 %v338
    %v535 = vunpack.c.l.b16 %v339
    %v536 = vunpack.c.l.b16 %v340
    %v537 = vunpack.c.l.b16 %v341
    %v538 = vunpack.c.l.b16 %v342
    %v539 = vunpack.c.l.b16 %v343
    %v540 = vunpack.c.l.b16 %v344
    %v541 = vunpack.c.l.b16 %v345
    %v542 = vunpack.c.l.b16 %v346
    %v543 = vunpack.c.l.b16 %v347
    %v544 = vunpack.c.l.b16 %v348
    %v545 = vunpack.c.l.b16 %v349
    %v546 = vunpack.c.l.b16 %v350
    %v547 = vunpack.c.l.b16 %v351
    %v548 = vunpack.c.l.b16 %v352
    %v549 = vunpack.c.l.b16 %v353
    %v550 = vunpack.c.l.b16 %v354
    %v551 = vunpack.c.l.b16 %v355
    %v552 = vunpack.c.l.b16 %v356
    %v553 = vunpack.c.l.b16 %v357
    %v554 = vunpack.c.l.b16 %v358
    %v555 = vunpack.c.l.b16 %v359
    %v556 = vunpack.c.l.b16 %v360
    %v557 = vunpack.c.l.b16 %v361
    %v558 = vunpack.c.l.b16 %v362
    %v559 = vunpack.c.l.b16 %v363
    %v560 = vunpack.c.l.b16 %v364
    %v561 = vunpack.c.l.b16 %v365
    %v562 = vunpack.c.l.b16 %v366
    %v563 = vunpack.c.l.b16 %v367
    %v564 = vunpack.c.l.b16 %v368
    %v565 = vunpack.c.l.b16 %v369
    %v566 = vunpack.c.l.b16 %v370
    %v567 = vunpack.c.l.b16 %v371
    %v568 = vunpack.c.l.b16 %v372
    %v569 = vunpack.c.l.b16 %v373
    %v570 = vunpack.c.l.b16 %v374
    %v571 = vunpack.c.l.b16 %v375
    %v572 = vunpack.c.l.b16 %v376
    %v573 = vunpack.c.l.b16 %v377
    %v574 = vunpack.c.l.b16 %v378
    %v575 = vunpack.c.l.b16 %v379
    %v576 = vunpack.c.l.b16 %v380
    %v577 = vunpack.c.l.b16 %v381
    %v578 = vunpack.c.l.b16 %v382
    %v579 = vunpack.c.l.b16 %v383
    %v580 = vunpack.c.l.b16 %v384
    %v581 = vunpack.c.l.b16 %v385
    %v582 = vunpack.c.l.b16 %v386
    %v583 = vunpack.c.l.b16 %v387
    %v584 = vpack.c.b16 %v489, %v488
    %v585 = vpack.c.b16 %v491, %v490
    %v586 = vpack.c.b16 %v493, %v492
    %v587 = vpack.c.b16 %v495, %v494
    %v588 = vpack.c.b16 %v497, %v496
    %v589 = vpack.c.b16 %v499, %v498
    %v590 = vpack.c.b16 %v501, %v500
    %v591 = vpack.c.b16 %v503, %v502
    %v592 = vpack.c.b16 %v505, %v504
    %v593 = vpack.c.b16 %v507, %v506
    %v594 = vpack.c.b16 %v509, %v508
    %v595 = vpack.c.b16 %v511, %v510
    %v596 = vpack.c.b16 %v513, %v512
    %v597 = vpack.c.b16 %v515, %v514
    %v598 = vpack.c.b16 %v517, %v516
    %v599 = vpack.c.b16 %v519, %v518
    %v600 = vpack.c.b16 %v521, %v520
    %v601 = vpack.c.b16 %v523, %v522
    %v602 = vpack.c.b16 %v525, %v524
    %v603 = vpack.c.b16 %v527, %v526
    %v604 = vpack.c.b16 %v529, %v528
    %v605 = vpack.c.b16 %v531, %v530
    %v606 = vpack.c.b16 %v533, %v532
    %v607 = vpack.c.b16 %v535, %v534
    %v608 = vpack.c.b16 %v537, %v536
    %v609 = vpack.c.b16 %v539, %v538
    %v610 = vpack.c.b16 %v541, %v540
    %v611 = vpack.c.b16 %v543, %v542
    %v612 = vpack.c.b16 %v545, %v544
    %v613 = vpack.c.b16 %v547, %v546
    %v614 = vpack.c.b16 %v549, %v548
    %v615 = vpack.c.b16 %v551, %v550
    %v616 = vpack.c.b16 %v553, %v552
    %v617 = vpack.c.b16 %v555, %v554
    %v618 = vpack.c.b16 %v557, %v556
    %v619 = vpack.c.b16 %v559, %v558
    %v620 = vpack.c.b16 %v561, %v560
    %v621 = vpack.c.b16 %v563, %v562
    %v622 = vpack.c.b16 %v565, %v564
    %v623 = vpack.c.b16 %v567, %v566
    %v624 = vpack.c.b16 %v569, %v568
    %v625 = vpack.c.b16 %v571, %v570
    %v626 = vpack.c.b16 %v573, %v572
    %v627 = vpack.c.b16 %v575, %v574
    %v628 = vpack.c.b16 %v577, %v576
    %v629 = vpack.c.b16 %v579, %v578
    %v630 = vpack.c.b16 %v581, %v580
    %v631 = vpack.c.b16 %v583, %v582
    %680 = vmatprep.subr.bf16.mxu0 0
    %681 = vmatpush1.bf16.msra.mxu0 %v584
    %682 = vmatprep.subr.bf16.mxu0 0
    %683 = vmatpush1.bf16.msra.mxu0 %v585
    %684 = vmatprep.subr.bf16.mxu0 0
    %685 = vmatpush1.bf16.msra.mxu0 %v586
    %686 = vmatprep.subr.bf16.mxu0 0
    %687 = vmatpush1.bf16.msra.mxu0 %v587
    %688 = vmatprep.subr.bf16.mxu0 0
    %689 = vmatpush1.bf16.msra.mxu0 %v588
    %690 = vmatprep.subr.bf16.mxu0 0
    %691 = vmatpush1.bf16.msra.mxu0 %v589
    %692 = vmatprep.subr.bf16.mxu0 0
    %693 = vmatpush1.bf16.msra.mxu0 %v590
    %694 = vmatprep.subr.bf16.mxu0 0
    %695 = vmatpush1.bf16.msra.mxu0 %v591
    %696 = vmatprep.subr.bf16.mxu0 0
    %697 = vmatpush1.bf16.msra.mxu0 %v592
    %698 = vmatprep.subr.bf16.mxu0 0
    %699 = vmatpush1.bf16.msra.mxu0 %v593
    %700 = vmatprep.subr.bf16.mxu0 0
    %701 = vmatpush1.bf16.msra.mxu0 %v594
    %702 = vmatprep.subr.bf16.mxu0 0
    %703 = vmatpush1.bf16.msra.mxu0 %v595
    %704 = vmatprep.subr.bf16.mxu0 0
    %705 = vmatpush1.bf16.msra.mxu0 %v596
    %706 = vmatprep.subr.bf16.mxu0 0
    %707 = vmatpush1.bf16.msra.mxu0 %v597
    %708 = vmatprep.subr.bf16.mxu0 0
    %709 = vmatpush1.bf16.msra.mxu0 %v598
    %710 = vmatprep.subr.bf16.mxu0 0
    %711 = vmatpush1.bf16.msra.mxu0 %v599
    %712 = vmatprep.mubr.bf16.mxu0 %v287
    %713 = vmatmul.mubr.bf16.gmra.mrb[0].mxu0 %v286
    %v714 = vpop.f32.mrb[0].mxu0
    %v715 = vadd.f32 %v391, %v714
    %v716 = vpop.f32.mrb[0].mxu0
    %v717 = vpop.f32.mrb[0].mxu0
    %v718 = vpop.f32.mrb[0].mxu0
    %719 = vdwg.mxu0
    %720 = vmatprep.subr.bf16.mxu0 0
    %721 = vmatpush1.bf16.msra.mxu0 %v600
    %722 = vmatprep.subr.bf16.mxu0 0
    %723 = vmatpush1.bf16.msra.mxu0 %v601
    %724 = vmatprep.subr.bf16.mxu0 0
    %725 = vmatpush1.bf16.msra.mxu0 %v602
    %726 = vmatprep.subr.bf16.mxu0 0
    %727 = vmatpush1.bf16.msra.mxu0 %v603
    %728 = vmatprep.subr.bf16.mxu0 0
    %729 = vmatpush1.bf16.msra.mxu0 %v604
    %730 = vmatprep.subr.bf16.mxu0 0
    %731 = vmatpush1.bf16.msra.mxu0 %v605
    %732 = vmatprep.subr.bf16.mxu0 0
    %733 = vmatpush1.bf16.msra.mxu0 %v606
    %734 = vmatprep.subr.bf16.mxu0 0
    %735 = vmatpush1.bf16.msra.mxu0 %v607
    %736 = vmatprep.subr.bf16.mxu0 0
    %737 = vmatpush1.bf16.msra.mxu0 %v608
    %738 = vmatprep.subr.bf16.mxu0 0
    %739 = vmatpush1.bf16.msra.mxu0 %v609
    %740 = vmatprep.subr.bf16.mxu0 0
    %741 = vmatpush1.bf16.msra.mxu0 %v610
    %742 = vmatprep.subr.bf16.mxu0 0
    %743 = vmatpush1.bf16.msra.mxu0 %v611
    %744 = vmatprep.subr.bf16.mxu0 0
    %745 = vmatpush1.bf16.msra.mxu0 %v612
    %746 = vmatprep.subr.bf16.mxu0 0
    %747 = vmatpush1.bf16.msra.mxu0 %v613
    %748 = vmatprep.subr.bf16.mxu0 0
    %749 = vmatpush1.bf16.msra.mxu0 %v614
    %750 = vmatprep.subr.bf16.mxu0 0
    %751 = vmatpush1.bf16.msra.mxu0 %v615
    %752 = vmatprep.mubr.bf16.mxu0 %v289
    %753 = vmatmul.mubr.bf16.gmra.mrb[0].mxu0 %v288
    %v754 = vpop.f32.mrb[0].mxu0
    %v755 = vadd.f32 %v715, %v754
    %v756 = vpop.f32.mrb[0].mxu0
    %v757 = vpop.f32.mrb[0].mxu0
    %v758 = vpop.f32.mrb[0].mxu0
    %759 = vdwg.mxu0
    %760 = vmatprep.subr.bf16.mxu0 0
    %761 = vmatpush1.bf16.msra.mxu0 %v616
    %762 = vmatprep.subr.bf16.mxu0 0
    %763 = vmatpush1.bf16.msra.mxu0 %v617
    %764 = vmatprep.subr.bf16.mxu0 0
    %765 = vmatpush1.bf16.msra.mxu0 %v618
    %766 = vmatprep.subr.bf16.mxu0 0
    %767 = vmatpush1.bf16.msra.mxu0 %v619
    %768 = vmatprep.subr.bf16.mxu0 0
    %769 = vmatpush1.bf16.msra.mxu0 %v620
    %770 = vmatprep.subr.bf16.mxu0 0
    %771 = vmatpush1.bf16.msra.mxu0 %v621
    %772 = vmatprep.subr.bf16.mxu0 0
    %773 = vmatpush1.bf16.msra.mxu0 %v622
    %774 = vmatprep.subr.bf16.mxu0 0
    %775 = vmatpush1.bf16.msra.mxu0 %v623
    %776 = vmatprep.subr.bf16.mxu0 0
    %777 = vmatpush1.bf16.msra.mxu0 %v624
    %778 = vmatprep.subr.bf16.mxu0 0
    %779 = vmatpush1.bf16.msra.mxu0 %v625
    %780 = vmatprep.subr.bf16.mxu0 0
    %781 = vmatpush1.bf16.msra.mxu0 %v626
    %782 = vmatprep.subr.bf16.mxu0 0
    %783 = vmatpush1.bf16.msra.mxu0 %v627
    %784 = vmatprep.subr.bf16.mxu0 0
    %785 = vmatpush1.bf16.msra.mxu0 %v628
    %786 = vmatprep.subr.bf16.mxu0 0
    %787 = vmatpush1.bf16.msra.mxu0 %v629
    %788 = vmatprep.subr.bf16.mxu0 0
    %789 = vmatpush1.bf16.msra.mxu0 %v630
    %790 = vmatprep.subr.bf16.mxu0 0
    %791 = vmatpush1.bf16.msra.mxu0 %v631
    %792 = vmatprep.mubr.bf16.mxu0 %v291
    %793 = vmatmul.mubr.bf16.gmra.mrb[0].mxu0 %v290
    %v794 = vpop.f32.mrb[0].mxu0
    %v795 = vadd.f32 %v755, %v794
    %v796 = vpop.f32.mrb[0].mxu0
    %v797 = vpop.f32.mrb[0].mxu0
    %v798 = vpop.f32.mrb[0].mxu0
    %799 = vdwg.mxu0
    %v800 = vtanh.pop %v795
    %vm801 = vcmask 261120
    %802 = vst.msk [vmem:[#allocation4] sm:$0xff] %vm801, %v800
    %v803 = vpack.c.bf16 %v800, %v800
    %v804 = vld [vmem:[%s5 + $0x180] sm:$0xf]
    %v805 = vld [vmem:[%s5 + $0x184] sm:$0xf]
    %v806 = vld [vmem:[%s5 + $0x188] sm:$0xf]
    %v807 = vld [vmem:[%s5 + $0x18c] sm:$0xf]
    %v808 = vlaneseq
    %v809 = vshrl.u32 %v808, 7
    %v810 = vsub.s32 0, %v809
    %v811 = vrot.slane %v277, %v810
    %v816 = vunpack.c.l.b16 %v804
    %v817 = vunpack.c.l.b16 %v805
    %v818 = vunpack.c.l.b16 %v806
    %v819 = vunpack.c.l.b16 %v807
    %v820 = vpack.c.b16 %v817, %v816
    %v821 = vpack.c.b16 %v819, %v818
    %v825 = vsel %vm801, %v803, 0
    %827 = vmatprep.subr.bf16.mxu0 0
    %828 = vmatpush1.bf16.msra.mxu0 %v820
    %829 = vmatprep.subr.bf16.mxu0 0
    %830 = vmatpush1.bf16.msra.mxu0 %v821
    %831 = vmatprep.subr.bf16.mxu0 0
    %832 = vmatpush1.bf16.msra.mxu0 0
    %833 = vmatprep.subr.bf16.mxu0 0
    %834 = vmatpush1.bf16.msra.mxu0 0
    %835 = vmatprep.subr.bf16.mxu0 0
    %836 = vmatpush1.bf16.msra.mxu0 0
    %837 = vmatprep.subr.bf16.mxu0 0
    %838 = vmatpush1.bf16.msra.mxu0 0
    %839 = vmatprep.subr.bf16.mxu0 0
    %840 = vmatpush1.bf16.msra.mxu0 0
    %841 = vmatprep.subr.bf16.mxu0 0
    %842 = vmatpush1.bf16.msra.mxu0 0
    %843 = vmatprep.subr.bf16.mxu0 0
    %844 = vmatpush1.bf16.msra.mxu0 0
    %845 = vmatprep.subr.bf16.mxu0 0
    %846 = vmatpush1.bf16.msra.mxu0 0
    %847 = vmatprep.subr.bf16.mxu0 0
    %848 = vmatpush1.bf16.msra.mxu0 0
    %849 = vmatprep.subr.bf16.mxu0 0
    %850 = vmatpush1.bf16.msra.mxu0 0
    %851 = vmatprep.subr.bf16.mxu0 0
    %852 = vmatpush1.bf16.msra.mxu0 0
    %853 = vmatprep.subr.bf16.mxu0 0
    %854 = vmatpush1.bf16.msra.mxu0 0
    %855 = vmatprep.subr.bf16.mxu0 0
    %856 = vmatpush1.bf16.msra.mxu0 0
    %857 = vmatprep.subr.bf16.mxu0 0
    %858 = vmatpush1.bf16.msra.mxu0 0
    %859 = vmatprep.mubr.bf16.mxu0 0
    %860 = vmatmul.mubr.bf16.gmra.mrb[0].mxu0 %v825
    %v861 = vpop.f32.mrb[0].mxu0
    %v862 = vadd.f32 %v811, %v861
    %v863 = vpop.f32.mrb[0].mxu0
    %v864 = vpop.f32.mrb[0].mxu0
    %v865 = vpop.f32.mrb[0].mxu0
    %866 = vdwg.mxu0
    %867 = vst.msk [vmem:[#allocation2] sm:$0xff] %vm801, %v862
    %v868 = vld [vmem:[%s5 + $0x190] sm:$0xf]
    %v869 = vld [vmem:[%s5 + $0x194] sm:$0xf]
    %v870 = vld [vmem:[%s5 + $0x198] sm:$0xf]
    %v871 = vld [vmem:[%s5 + $0x19c] sm:$0xf]
    %v872 = vld [vmem:[%s0] sm:$0x3]
    %v873 = vld [vmem:[#allocation6] sm:$0x3]
    %v874 = vld [vmem:[#allocation2] ss:$4 sm:$0x3]
    %v875 = vpack.c.bf16 %v873, %v873
    %v880 = vunpack.c.l.b16 %v868
    %v881 = vunpack.c.l.b16 %v869
    %v882 = vunpack.c.l.b16 %v870
    %v883 = vunpack.c.l.b16 %v871
    %v884 = vpack.c.b16 %v881, %v880
    %v885 = vpack.c.b16 %v883, %v882
    %v889 = vsel %vm801, %v875, 0
    %891 = vmatprep.subr.bf16.mxu0 0
    %892 = vmatpush1.bf16.msra.mxu0 %v884
    %893 = vmatprep.subr.bf16.mxu0 0
    %894 = vmatpush1.bf16.msra.mxu0 %v885
    %895 = vmatprep.subr.bf16.mxu0 0
    %896 = vmatpush1.bf16.msra.mxu0 0
    %897 = vmatprep.subr.bf16.mxu0 0
    %898 = vmatpush1.bf16.msra.mxu0 0
    %899 = vmatprep.subr.bf16.mxu0 0
    %900 = vmatpush1.bf16.msra.mxu0 0
    %901 = vmatprep.subr.bf16.mxu0 0
    %902 = vmatpush1.bf16.msra.mxu0 0
    %903 = vmatprep.subr.bf16.mxu0 0
    %904 = vmatpush1.bf16.msra.mxu0 0
    %905 = vmatprep.subr.bf16.mxu0 0
    %906 = vmatpush1.bf16.msra.mxu0 0
    %907 = vmatprep.subr.bf16.mxu0 0
    %908 = vmatpush1.bf16.msra.mxu0 0
    %909 = vmatprep.subr.bf16.mxu0 0
    %910 = vmatpush1.bf16.msra.mxu0 0
    %911 = vmatprep.subr.bf16.mxu0 0
    %912 = vmatpush1.bf16.msra.mxu0 0
    %913 = vmatprep.subr.bf16.mxu0 0
    %914 = vmatpush1.bf16.msra.mxu0 0
    %915 = vmatprep.subr.bf16.mxu0 0
    %916 = vmatpush1.bf16.msra.mxu0 0
    %917 = vmatprep.subr.bf16.mxu0 0
    %918 = vmatpush1.bf16.msra.mxu0 0
    %919 = vmatprep.subr.bf16.mxu0 0
    %920 = vmatpush1.bf16.msra.mxu0 0
    %921 = vmatprep.subr.bf16.mxu0 0
    %922 = vmatpush1.bf16.msra.mxu0 0
    %923 = vmatprep.mubr.bf16.mxu0 0
    %924 = vmatmul.mubr.bf16.gmra.mrb[0].mxu0 %v889
    %v925 = vpop.f32.mrb[0].mxu0
    %v926 = vadd.f32 0.0, %v925
    %v927 = vpop.f32.mrb[0].mxu0
    %v928 = vpop.f32.mrb[0].mxu0
    %v929 = vpop.f32.mrb[0].mxu0
    %930 = vdwg.mxu0
    %v931 = vadd.f32 %v874, %v926
    %v932 = vtanh.pop %v931
    %vm933 = vcmp.gt.s32.totalorder %v872, 0
    %v934 = vsel %vm933, 1, 0
    %935 = vset.pattern.permute.xlu0 0
    %936 = vperm.xlu0 %935, %v934
    %v937 = vpop.permute.xlu0 %936
    %vm938 = vcmp.eq.s32.totalorder %v937, 1
    %v939 = vsel %vm938, %v932, %v873
    %s940 = scalar_lea.vmem [#allocation2], 1
    %v941 = vld [vmem:[%s940] ss:$4 sm:$0x3]
    %v942 = vpack.c.bf16 %v939, %v939
    %v944 = vsel %vm801, %v942, 0
    %946 = vmatprep.subr.bf16.mxu0 0
    %947 = vmatpush1.bf16.msra.mxu0 %v884
    %948 = vmatprep.subr.bf16.mxu0 0
    %949 = vmatpush1.bf16.msra.mxu0 %v885
    %950 = vmatprep.subr.bf16.mxu0 0
    %951 = vmatpush1.bf16.msra.mxu0 0
    %952 = vmatprep.subr.bf16.mxu0 0
    %953 = vmatpush1.bf16.msra.mxu0 0
    %954 = vmatprep.subr.bf16.mxu0 0
    %955 = vmatpush1.bf16.msra.mxu0 0
    %956 = vmatprep.subr.bf16.mxu0 0
    %957 = vmatpush1.bf16.msra.mxu0 0
    %958 = vmatprep.subr.bf16.mxu0 0
    %959 = vmatpush1.bf16.msra.mxu0 0
    %960 = vmatprep.subr.bf16.mxu0 0
    %961 = vmatpush1.bf16.msra.mxu0 0
    %962 = vmatprep.subr.bf16.mxu0 0
    %963 = vmatpush1.bf16.msra.mxu0 0
    %964 = vmatprep.subr.bf16.mxu0 0
    %965 = vmatpush1.bf16.msra.mxu0 0
    %966 = vmatprep.subr.bf16.mxu0 0
    %967 = vmatpush1.bf16.msra.mxu0 0
    %968 = vmatprep.subr.bf16.mxu0 0
    %969 = vmatpush1.bf16.msra.mxu0 0
    %970 = vmatprep.subr.bf16.mxu0 0
    %971 = vmatpush1.bf16.msra.mxu0 0
    %972 = vmatprep.subr.bf16.mxu0 0
    %973 = vmatpush1.bf16.msra.mxu0 0
    %974 = vmatprep.subr.bf16.mxu0 0
    %975 = vmatpush1.bf16.msra.mxu0 0
    %976 = vmatprep.subr.bf16.mxu0 0
    %977 = vmatpush1.bf16.msra.mxu0 0
    %978 = vmatprep.mubr.bf16.mxu0 0
    %979 = vmatmul.mubr.bf16.gmra.mrb[0].mxu0 %v944
    %v980 = vpop.f32.mrb[0].mxu0
    %v981 = vadd.f32 0.0, %v980
    %v982 = vpop.f32.mrb[0].mxu0
    %v983 = vpop.f32.mrb[0].mxu0
    %v984 = vpop.f32.mrb[0].mxu0
    %985 = vdwg.mxu0
    %v986 = vadd.f32 %v941, %v981
    %v987 = vtanh.pop %v986
    %vm988 = vcmp.gt.s32.totalorder %v872, 1
    %v989 = vsel %vm988, 1, 0
    %990 = vset.pattern.permute.xlu0 0
    %991 = vperm.xlu0 %990, %v989
    %v992 = vpop.permute.xlu0 %991
    %vm993 = vcmp.eq.s32.totalorder %v992, 1
    %v994 = vsel %vm993, %v987, %v939
    %s995 = scalar_lea.vmem [#allocation2], 2
    %v996 = vld [vmem:[%s995] ss:$4 sm:$0x3]
    %v997 = vpack.c.bf16 %v994, %v994
    %v999 = vsel %vm801, %v997, 0
    %1001 = vmatprep.subr.bf16.mxu0 0
    %1002 = vmatpush1.bf16.msra.mxu0 %v884
    %1003 = vmatprep.subr.bf16.mxu0 0
    %1004 = vmatpush1.bf16.msra.mxu0 %v885
    %1005 = vmatprep.subr.bf16.mxu0 0
    %1006 = vmatpush1.bf16.msra.mxu0 0
    %1007 = vmatprep.subr.bf16.mxu0 0
    %1008 = vmatpush1.bf16.msra.mxu0 0
    %1009 = vmatprep.subr.bf16.mxu0 0
    %1010 = vmatpush1.bf16.msra.mxu0 0
    %1011 = vmatprep.subr.bf16.mxu0 0
    %1012 = vmatpush1.bf16.msra.mxu0 0
    %1013 = vmatprep.subr.bf16.mxu0 0
    %1014 = vmatpush1.bf16.msra.mxu0 0
    %1015 = vmatprep.subr.bf16.mxu0 0
    %1016 = vmatpush1.bf16.msra.mxu0 0
    %1017 = vmatprep.subr.bf16.mxu0 0
    %1018 = vmatpush1.bf16.msra.mxu0 0
    %1019 = vmatprep.subr.bf16.mxu0 0
    %1020 = vmatpush1.bf16.msra.mxu0 0
    %1021 = vmatprep.subr.bf16.mxu0 0
    %1022 = vmatpush1.bf16.msra.mxu0 0
    %1023 = vmatprep.subr.bf16.mxu0 0
    %1024 = vmatpush1.bf16.msra.mxu0 0
    %1025 = vmatprep.subr.bf16.mxu0 0
    %1026 = vmatpush1.bf16.msra.mxu0 0
    %1027 = vmatprep.subr.bf16.mxu0 0
    %1028 = vmatpush1.bf16.msra.mxu0 0
    %1029 = vmatprep.subr.bf16.mxu0 0
    %1030 = vmatpush1.bf16.msra.mxu0 0
    %1031 = vmatprep.subr.bf16.mxu0 0
    %1032 = vmatpush1.bf16.msra.mxu0 0
    %1033 = vmatprep.mubr.bf16.mxu0 0
    %1034 = vmatmul.mubr.bf16.gmra.mrb[0].mxu0 %v999
    %v1035 = vpop.f32.mrb[0].mxu0
    %v1036 = vadd.f32 0.0, %v1035
    %v1037 = vpop.f32.mrb[0].mxu0
    %v1038 = vpop.f32.mrb[0].mxu0
    %v1039 = vpop.f32.mrb[0].mxu0
    %1040 = vdwg.mxu0
    %v1041 = vadd.f32 %v996, %v1036
    %v1042 = vtanh.pop %v1041
    %vm1043 = vcmp.gt.s32.totalorder %v872, 2
    %v1044 = vsel %vm1043, 1, 0
    %1045 = vset.pattern.permute.xlu0 0
    %1046 = vperm.xlu0 %1045, %v1044
    %v1047 = vpop.permute.xlu0 %1046
    %vm1048 = vcmp.eq.s32.totalorder %v1047, 1
    %v1049 = vsel %vm1048, %v1042, %v994
    %s1050 = scalar_lea.vmem [#allocation2], 3
    %v1051 = vld [vmem:[%s1050] ss:$4 sm:$0x3]
    %v1052 = vpack.c.bf16 %v1049, %v1049
    %v1054 = vsel %vm801, %v1052, 0
    %1056 = vmatprep.subr.bf16.mxu0 0
    %1057 = vmatpush1.bf16.msra.mxu0 %v884
    %1058 = vmatprep.subr.bf16.mxu0 0
    %1059 = vmatpush1.bf16.msra.mxu0 %v885
    %1060 = vmatprep.subr.bf16.mxu0 0
    %1061 = vmatpush1.bf16.msra.mxu0 0
    %1062 = vmatprep.subr.bf16.mxu0 0
    %1063 = vmatpush1.bf16.msra.mxu0 0
    %1064 = vmatprep.subr.bf16.mxu0 0
    %1065 = vmatpush1.bf16.msra.mxu0 0
    %1066 = vmatprep.subr.bf16.mxu0 0
    %1067 = vmatpush1.bf16.msra.mxu0 0
    %1068 = vmatprep.subr.bf16.mxu0 0
    %1069 = vmatpush1.bf16.msra.mxu0 0
    %1070 = vmatprep.subr.bf16.mxu0 0
    %1071 = vmatpush1.bf16.msra.mxu0 0
    %1072 = vmatprep.subr.bf16.mxu0 0
    %1073 = vmatpush1.bf16.msra.mxu0 0
    %1074 = vmatprep.subr.bf16.mxu0 0
    %1075 = vmatpush1.bf16.msra.mxu0 0
    %1076 = vmatprep.subr.bf16.mxu0 0
    %1077 = vmatpush1.bf16.msra.mxu0 0
    %1078 = vmatprep.subr.bf16.mxu0 0
    %1079 = vmatpush1.bf16.msra.mxu0 0
    %1080 = vmatprep.subr.bf16.mxu0 0
    %1081 = vmatpush1.bf16.msra.mxu0 0
    %1082 = vmatprep.subr.bf16.mxu0 0
    %1083 = vmatpush1.bf16.msra.mxu0 0
    %1084 = vmatprep.subr.bf16.mxu0 0
    %1085 = vmatpush1.bf16.msra.mxu0 0
    %1086 = vmatprep.subr.bf16.mxu0 0
    %1087 = vmatpush1.bf16.msra.mxu0 0
    %1088 = vmatprep.mubr.bf16.mxu0 0
    %1089 = vmatmul.mubr.bf16.gmra.mrb[0].mxu0 %v1054
    %v1090 = vpop.f32.mrb[0].mxu0
    %v1091 = vadd.f32 0.0, %v1090
    %v1092 = vpop.f32.mrb[0].mxu0
    %v1093 = vpop.f32.mrb[0].mxu0
    %v1094 = vpop.f32.mrb[0].mxu0
    %1095 = vdwg.mxu0
    %v1096 = vadd.f32 %v1051, %v1091
    %v1097 = vtanh.pop %v1096
    %vm1098 = vcmp.gt.s32.totalorder %v872, 3
    %v1099 = vsel %vm1098, 1, 0
    %1100 = vset.pattern.permute.xlu0 0
    %1101 = vperm.xlu0 %1100, %v1099
    %v1102 = vpop.permute.xlu0 %1101
    %vm1103 = vcmp.eq.s32.totalorder %v1102, 1
    %v1104 = vsel %vm1103, %v1097, %v1049
    %vm1105 = vcmask 254976
    %1106 = vst.msk [vmem:[#allocation6] sm:$0x3] %vm1105, %v1104
    %v1107 = vlaneseq
    %v1108 = vand.u32 %v1107, 127
    %v1109 = vld [vmem:[%s1] sm:$0x3]
    %1110 = vset.pattern.permute.xlu0 0
    %1111 = vperm.xlu0 %1110, %v1109
    %v1112 = vpop.permute.xlu0 %1111
    %vm1113 = vcmp.eq.s32.totalorder %v1108, %v1112
    %v1114 = vsel %vm1113, 1, 0
    %v1115 = vcvt.s32.f32 %v1114
    %v1116 = vpack.c.bf16 %v1115, %v1115
    %v1117 = vld [vmem:[#allocation3] sm:$0xff]
    %v1118 = vpack.c.bf16 %v1104, %v1104
    %v1119 = vld [vmem:[%s6] sm:$0xff]
    %v1120 = vld [vmem:[%s6 + $0x8] sm:$0xff]
    %v1121 = vld [vmem:[%s6 + $0x10] sm:$0xff]
    %v1122 = vld [vmem:[%s6 + $0x18] sm:$0xff]
    %v1123 = vld [vmem:[%s6 + $0x20] sm:$0xff]
    %v1124 = vld [vmem:[%s6 + $0x28] sm:$0xff]
    %v1125 = vld [vmem:[%s6 + $0x30] sm:$0xff]
    %v1126 = vld [vmem:[%s6 + $0x38] sm:$0xff]
    %v1135 = vunpack.c.l.b16 %v1119
    %v1136 = vunpack.c.h.b16 %v1119
    %v1137 = vunpack.c.l.b16 %v1120
    %v1138 = vunpack.c.h.b16 %v1120
    %v1139 = vunpack.c.l.b16 %v1121
    %v1140 = vunpack.c.h.b16 %v1121
    %v1141 = vunpack.c.l.b16 %v1122
    %v1142 = vunpack.c.h.b16 %v1122
    %v1143 = vunpack.c.l.b16 %v1123
    %v1144 = vunpack.c.h.b16 %v1123
    %v1145 = vunpack.c.l.b16 %v1124
    %v1146 = vunpack.c.h.b16 %v1124
    %v1147 = vunpack.c.l.b16 %v1125
    %v1148 = vunpack.c.h.b16 %v1125
    %v1149 = vunpack.c.l.b16 %v1126
    %v1150 = vunpack.c.h.b16 %v1126
    %v1151 = vpack.c.b16 %v1139, %v1135
    %v1152 = vpack.c.b16 %v1140, %v1136
    %v1153 = vpack.c.b16 %v1141, %v1137
    %v1154 = vpack.c.b16 %v1142, %v1138
    %v1155 = vpack.c.b16 %v1147, %v1143
    %v1156 = vpack.c.b16 %v1148, %v1144
    %v1157 = vpack.c.b16 %v1149, %v1145
    %v1158 = vpack.c.b16 %v1150, %v1146
    %v1168 = vsel %vm801, %v1118, 0
    %1170 = vmatprep.subr.bf16.mxu0 %v1152
    %1171 = vmatpush1.bf16.msra.mxu0 %v1151
    %1172 = vmatprep.subr.bf16.mxu0 %v1156
    %1173 = vmatpush1.bf16.msra.mxu0 %v1155
    %1174 = vmatprep.subr.bf16.mxu0 0
    %1175 = vmatpush1.bf16.msra.mxu0 0
    %1176 = vmatprep.subr.bf16.mxu0 0
    %1177 = vmatpush1.bf16.msra.mxu0 0
    %1178 = vmatprep.subr.bf16.mxu0 0
    %1179 = vmatpush1.bf16.msra.mxu0 0
    %1180 = vmatprep.subr.bf16.mxu0 0
    %1181 = vmatpush1.bf16.msra.mxu0 0
    %1182 = vmatprep.subr.bf16.mxu0 0
    %1183 = vmatpush1.bf16.msra.mxu0 0
    %1184 = vmatprep.subr.bf16.mxu0 0
    %1185 = vmatpush1.bf16.msra.mxu0 0
    %1186 = vmatprep.subr.bf16.mxu0 0
    %1187 = vmatpush1.bf16.msra.mxu0 0
    %1188 = vmatprep.subr.bf16.mxu0 0
    %1189 = vmatpush1.bf16.msra.mxu0 0
    %1190 = vmatprep.subr.bf16.mxu0 0
    %1191 = vmatpush1.bf16.msra.mxu0 0
    %1192 = vmatprep.subr.bf16.mxu0 0
    %1193 = vmatpush1.bf16.msra.mxu0 0
    %1194 = vmatprep.subr.bf16.mxu0 0
    %1195 = vmatpush1.bf16.msra.mxu0 0
    %1196 = vmatprep.subr.bf16.mxu0 0
    %1197 = vmatpush1.bf16.msra.mxu0 0
    %1198 = vmatprep.subr.bf16.mxu0 0
    %1199 = vmatpush1.bf16.msra.mxu0 0
    %1200 = vmatprep.subr.bf16.mxu0 0
    %1201 = vmatpush1.bf16.msra.mxu0 0
    %1202 = vmatprep.mubr.bf16.mxu0 0
    %1203 = vmatmul.mubr.bf16.gmra.mrb[0].mxu0 %v1168
    %v1204 = vpop.f32.mrb[0].mxu0
    %v1205 = vadd.f32 0.0, %v1204
    %v1206 = vpop.f32.mrb[0].mxu0
    %v1207 = vadd.f32 0.0, %v1206
    %v1208 = vpop.f32.mrb[0].mxu0
    %v1209 = vpop.f32.mrb[0].mxu0
    %1210 = vdwg.mxu0
    %1211 = vmatprep.subr.bf16.mxu0 %v1154
    %1212 = vmatpush1.bf16.msra.mxu0 %v1153
    %1213 = vmatprep.subr.bf16.mxu0 %v1158
    %1214 = vmatpush1.bf16.msra.mxu0 %v1157
    %1215 = vmatprep.subr.bf16.mxu0 0
    %1216 = vmatpush1.bf16.msra.mxu0 0
    %1217 = vmatprep.subr.bf16.mxu0 0
    %1218 = vmatpush1.bf16.msra.mxu0 0
    %1219 = vmatprep.subr.bf16.mxu0 0
    %1220 = vmatpush1.bf16.msra.mxu0 0
    %1221 = vmatprep.subr.bf16.mxu0 0
    %1222 = vmatpush1.bf16.msra.mxu0 0
    %1223 = vmatprep.subr.bf16.mxu0 0
    %1224 = vmatpush1.bf16.msra.mxu0 0
    %1225 = vmatprep.subr.bf16.mxu0 0
    %1226 = vmatpush1.bf16.msra.mxu0 0
    %1227 = vmatprep.subr.bf16.mxu0 0
    %1228 = vmatpush1.bf16.msra.mxu0 0
    %1229 = vmatprep.subr.bf16.mxu0 0
    %1230 = vmatpush1.bf16.msra.mxu0 0
    %1231 = vmatprep.subr.bf16.mxu0 0
    %1232 = vmatpush1.bf16.msra.mxu0 0
    %1233 = vmatprep.subr.bf16.mxu0 0
    %1234 = vmatpush1.bf16.msra.mxu0 0
    %1235 = vmatprep.subr.bf16.mxu0 0
    %1236 = vmatpush1.bf16.msra.mxu0 0
    %1237 = vmatprep.subr.bf16.mxu0 0
    %1238 = vmatpush1.bf16.msra.mxu0 0
    %1239 = vmatprep.subr.bf16.mxu0 0
    %1240 = vmatpush1.bf16.msra.mxu0 0
    %1241 = vmatprep.subr.bf16.mxu0 0
    %1242 = vmatpush1.bf16.msra.mxu0 0
    %1243 = vmatprep.mubr.bf16.mxu0 0
    %1244 = vmatmul.mubr.bf16.gmra.mrb[0].mxu0 %v1168
    %v1245 = vpop.f32.mrb[0].mxu0
    %v1246 = vadd.f32 0.0, %v1245
    %v1247 = vpop.f32.mrb[0].mxu0
    %v1248 = vadd.f32 0.0, %v1247
    %v1249 = vpop.f32.mrb[0].mxu0
    %v1250 = vpop.f32.mrb[0].mxu0
    %1251 = vdwg.mxu0
    %v1256 = vcombine.low %v1205, %v1207
    %v1257 = vcombine.low %v1246, %v1248
    %v1259 = vunpack.c.l.s4 1983009808
    %v1260 = vunpack.c.0.s8 %v1259
    %v1261 = vlaneseq
    %v1262 = vshrl.u32 %v1261, 7
    %v1263 = vsub.s32 %v1260, %v1262
    %v1264 = vrot.slane %v1256, %v1263
    %v1266 = vunpack.c.l.s4 1983009808
    %v1267 = vunpack.c.0.s8 %v1266
    %v1268 = vlaneseq
    %v1269 = vshrl.u32 %v1268, 7
    %v1270 = vsub.s32 %v1267, %v1269
    %v1271 = vrot.slane %v1257, %v1270
    %v1272 = vcombine.low %v1264, %v1271
    %v1274 = vadd.f32 %v1117, %v1272
    %v1275 = vld [vmem:[%s6 + $0xc0] sm:$0xff]
    %v1276 = vld [vmem:[%s6 + $0xc8] sm:$0xff]
    %v1277 = vld [vmem:[%s6 + $0xd0] sm:$0xff]
    %v1278 = vld [vmem:[%s6 + $0xd8] sm:$0xff]
    %v1283 = vunpack.c.l.b16 %v1275
    %v1284 = vunpack.c.h.b16 %v1275
    %v1285 = vunpack.c.l.b16 %v1276
    %v1286 = vunpack.c.h.b16 %v1276
    %v1287 = vunpack.c.l.b16 %v1277
    %v1288 = vunpack.c.h.b16 %v1277
    %v1289 = vunpack.c.l.b16 %v1278
    %v1290 = vunpack.c.h.b16 %v1278
    %v1291 = vpack.c.b16 %v1287, %v1283
    %v1292 = vpack.c.b16 %v1288, %v1284
    %v1293 = vpack.c.b16 %v1289, %v1285
    %v1294 = vpack.c.b16 %v1290, %v1286
    %vm1299 = vcmask 130048
    %v1301 = vsel %vm1299, %v1116, 0
    %1303 = vmatprep.subr.bf16.mxu0 %v1292
    %1304 = vmatpush1.bf16.msra.mxu0 %v1291
    %1305 = vmatprep.subr.bf16.mxu0 0
    %1306 = vmatpush1.bf16.msra.mxu0 0
    %1307 = vmatprep.subr.bf16.mxu0 0
    %1308 = vmatpush1.bf16.msra.mxu0 0
    %1309 = vmatprep.subr.bf16.mxu0 0
    %1310 = vmatpush1.bf16.msra.mxu0 0
    %1311 = vmatprep.subr.bf16.mxu0 0
    %1312 = vmatpush1.bf16.msra.mxu0 0
    %1313 = vmatprep.subr.bf16.mxu0 0
    %1314 = vmatpush1.bf16.msra.mxu0 0
    %1315 = vmatprep.subr.bf16.mxu0 0
    %1316 = vmatpush1.bf16.msra.mxu0 0
    %1317 = vmatprep.subr.bf16.mxu0 0
    %1318 = vmatpush1.bf16.msra.mxu0 0
    %1319 = vmatprep.subr.bf16.mxu0 0
    %1320 = vmatpush1.bf16.msra.mxu0 0
    %1321 = vmatprep.subr.bf16.mxu0 0
    %1322 = vmatpush1.bf16.msra.mxu0 0
    %1323 = vmatprep.subr.bf16.mxu0 0
    %1324 = vmatpush1.bf16.msra.mxu0 0
    %1325 = vmatprep.subr.bf16.mxu0 0
    %1326 = vmatpush1.bf16.msra.mxu0 0
    %1327 = vmatprep.subr.bf16.mxu0 0
    %1328 = vmatpush1.bf16.msra.mxu0 0
    %1329 = vmatprep.subr.bf16.mxu0 0
    %1330 = vmatpush1.bf16.msra.mxu0 0
    %1331 = vmatprep.subr.bf16.mxu0 0
    %1332 = vmatpush1.bf16.msra.mxu0 0
    %1333 = vmatprep.subr.bf16.mxu0 0
    %1334 = vmatpush1.bf16.msra.mxu0 0
    %1335 = vmatprep.mubr.bf16.mxu0 0
    %1336 = vmatmul.mubr.bf16.gmra.mrb[0].mxu0 %v1301
    %v1337 = vpop.f32.mrb[0].mxu0
    %v1338 = vadd.f32 0.0, %v1337
    %v1339 = vpop.f32.mrb[0].mxu0
    %v1340 = vadd.f32 0.0, %v1339
    %v1341 = vpop.f32.mrb[0].mxu0
    %v1342 = vpop.f32.mrb[0].mxu0
    %1343 = vdwg.mxu0
    %1344 = vmatprep.subr.bf16.mxu0 %v1294
    %1345 = vmatpush1.bf16.msra.mxu0 %v1293
    %1346 = vmatprep.subr.bf16.mxu0 0
    %1347 = vmatpush1.bf16.msra.mxu0 0
    %1348 = vmatprep.subr.bf16.mxu0 0
    %1349 = vmatpush1.bf16.msra.mxu0 0
    %1350 = vmatprep.subr.bf16.mxu0 0
    %1351 = vmatpush1.bf16.msra.mxu0 0
    %1352 = vmatprep.subr.bf16.mxu0 0
    %1353 = vmatpush1.bf16.msra.mxu0 0
    %1354 = vmatprep.subr.bf16.mxu0 0
    %1355 = vmatpush1.bf16.msra.mxu0 0
    %1356 = vmatprep.subr.bf16.mxu0 0
    %1357 = vmatpush1.bf16.msra.mxu0 0
    %1358 = vmatprep.subr.bf16.mxu0 0
    %1359 = vmatpush1.bf16.msra.mxu0 0
    %1360 = vmatprep.subr.bf16.mxu0 0
    %1361 = vmatpush1.bf16.msra.mxu0 0
    %1362 = vmatprep.subr.bf16.mxu0 0
    %1363 = vmatpush1.bf16.msra.mxu0 0
    %1364 = vmatprep.subr.bf16.mxu0 0
    %1365 = vmatpush1.bf16.msra.mxu0 0
    %1366 = vmatprep.subr.bf16.mxu0 0
    %1367 = vmatpush1.bf16.msra.mxu0 0
    %1368 = vmatprep.subr.bf16.mxu0 0
    %1369 = vmatpush1.bf16.msra.mxu0 0
    %1370 = vmatprep.subr.bf16.mxu0 0
    %1371 = vmatpush1.bf16.msra.mxu0 0
    %1372 = vmatprep.subr.bf16.mxu0 0
    %1373 = vmatpush1.bf16.msra.mxu0 0
    %1374 = vmatprep.subr.bf16.mxu0 0
    %1375 = vmatpush1.bf16.msra.mxu0 0
    %1376 = vmatprep.mubr.bf16.mxu0 0
    %1377 = vmatmul.mubr.bf16.gmra.mrb[0].mxu0 %v1301
    %v1378 = vpop.f32.mrb[0].mxu0
    %v1379 = vadd.f32 0.0, %v1378
    %v1380 = vpop.f32.mrb[0].mxu0
    %v1381 = vadd.f32 0.0, %v1380
    %v1382 = vpop.f32.mrb[0].mxu0
    %v1383 = vpop.f32.mrb[0].mxu0
    %1384 = vdwg.mxu0
    %v1389 = vcombine.low %v1338, %v1340
    %v1390 = vcombine.low %v1379, %v1381
    %v1392 = vunpack.c.l.s4 1983009808
    %v1393 = vunpack.c.0.s8 %v1392
    %v1394 = vlaneseq
    %v1395 = vshrl.u32 %v1394, 7
    %v1396 = vsub.s32 %v1393, %v1395
    %v1397 = vrot.slane %v1389, %v1396
    %v1399 = vunpack.c.l.s4 1983009808
    %v1400 = vunpack.c.0.s8 %v1399
    %v1401 = vlaneseq
    %v1402 = vshrl.u32 %v1401, 7
    %v1403 = vsub.s32 %v1400, %v1402
    %v1404 = vrot.slane %v1390, %v1403
    %v1405 = vcombine.low %v1397, %v1404
    %v1407 = vadd.f32 %v1274, %v1405
    %v1408 = vmax.f32 %v1407, 0.0
    %1409 = vst [vmem:[#allocation8] sm:$0xff] %v1408
    %v1411 = vcombine.high %v1408, %v1408
    %v1413 = vunpack.c.l.s4 1983009808
    %v1414 = vunpack.c.0.s8 %v1413
    %v1415 = vlaneseq
    %v1416 = vshrl.u32 %v1415, 7
    %v1417 = vsub.s32 %v1414, %v1416
    %v1418 = vrot.slane %v1408, %v1417
    %v1420 = vunpack.c.l.s4 1983009808
    %v1421 = vunpack.c.0.s8 %v1420
    %v1422 = vlaneseq
    %v1423 = vshrl.u32 %v1422, 7
    %v1424 = vsub.s32 %v1421, %v1423
    %v1425 = vrot.slane %v1411, %v1424
    %v1426 = vcombine.high %v1418, %v1418
    %v1427 = vcombine.high %v1425, %v1425
    %v1432 = vpack.c.bf16 %v1418, %v1418
    %v1433 = vpack.c.bf16 %v1426, %v1426
    %v1434 = vpack.c.bf16 %v1425, %v1425
    %v1435 = vpack.c.bf16 %v1427, %v1427
    %v1436 = vld [vmem:[%s7] sm:$0xff]
    %v1437 = vld [vmem:[%s7 + $0x8] sm:$0xff]
    %v1438 = vld [vmem:[%s7 + $0x10] sm:$0xff]
    %v1439 = vld [vmem:[%s7 + $0x18] sm:$0xff]
    %v1440 = vld [vmem:[%s7 + $0x20] sm:$0xff]
    %v1441 = vld [vmem:[%s7 + $0x28] sm:$0xff]
    %v1442 = vld [vmem:[%s7 + $0x30] sm:$0xff]
    %v1443 = vld [vmem:[%s7 + $0x38] sm:$0xff]
    %v1444 = vld [vmem:[%s7 + $0x40] sm:$0xff]
    %v1445 = vld [vmem:[%s7 + $0x48] sm:$0xff]
    %v1446 = vld [vmem:[%s7 + $0x50] sm:$0xff]
    %v1447 = vld [vmem:[%s7 + $0x58] sm:$0xff]
    %v1448 = vld [vmem:[%s7 + $0x60] sm:$0xff]
    %v1449 = vld [vmem:[%s7 + $0x68] sm:$0xff]
    %v1450 = vld [vmem:[%s7 + $0x70] sm:$0xff]
    %v1451 = vld [vmem:[%s7 + $0x78] sm:$0xff]
    %v1452 = vld [vmem:[%s7 + $0x80] sm:$0xff]
    %v1453 = vld [vmem:[%s7 + $0x88] sm:$0xff]
    %v1454 = vld [vmem:[%s7 + $0x90] sm:$0xff]
    %v1455 = vld [vmem:[%s7 + $0x98] sm:$0xff]
    %v1456 = vld [vmem:[%s7 + $0xa0] sm:$0xff]
    %v1457 = vld [vmem:[%s7 + $0xa8] sm:$0xff]
    %v1458 = vld [vmem:[%s7 + $0xb0] sm:$0xff]
    %v1459 = vld [vmem:[%s7 + $0xb8] sm:$0xff]
    %v1460 = vld [vmem:[%s7 + $0xc0] sm:$0xff]
    %v1461 = vld [vmem:[%s7 + $0xc8] sm:$0xff]
    %v1462 = vld [vmem:[%s7 + $0xd0] sm:$0xff]
    %v1463 = vld [vmem:[%s7 + $0xd8] sm:$0xff]
    %v1464 = vld [vmem:[%s7 + $0xe0] sm:$0xff]
    %v1465 = vld [vmem:[%s7 + $0xe8] sm:$0xff]
    %v1466 = vld [vmem:[%s7 + $0xf0] sm:$0xff]
    %v1467 = vld [vmem:[%s7 + $0xf8] sm:$0xff]
    %v1468 = vld [vmem:[%s7 + $0x100] sm:$0xff]
    %v1469 = vld [vmem:[%s7 + $0x108] sm:$0xff]
    %v1470 = vld [vmem:[%s7 + $0x110] sm:$0xff]
    %v1471 = vld [vmem:[%s7 + $0x118] sm:$0xff]
    %v1472 = vld [vmem:[%s7 + $0x120] sm:$0xff]
    %v1473 = vld [vmem:[%s7 + $0x128] sm:$0xff]
    %v1474 = vld [vmem:[%s7 + $0x130] sm:$0xff]
    %v1475 = vld [vmem:[%s7 + $0x138] sm:$0xff]
    %v1476 = vld [vmem:[%s7 + $0x140] sm:$0xff]
    %v1477 = vld [vmem:[%s7 + $0x148] sm:$0xff]
    %v1478 = vld [vmem:[%s7 + $0x150] sm:$0xff]
    %v1479 = vld [vmem:[%s7 + $0x158] sm:$0xff]
    %v1480 = vld [vmem:[%s7 + $0x160] sm:$0xff]
    %v1481 = vld [vmem:[%s7 + $0x168] sm:$0xff]
    %v1482 = vld [vmem:[%s7 + $0x170] sm:$0xff]
    %v1483 = vld [vmem:[%s7 + $0x178] sm:$0xff]
    %v1484 = vld [vmem:[%s7 + $0x180] sm:$0xff]
    %v1485 = vld [vmem:[%s7 + $0x188] sm:$0xff]
    %v1486 = vld [vmem:[%s7 + $0x190] sm:$0xff]
    %v1487 = vld [vmem:[%s7 + $0x198] sm:$0xff]
    %v1488 = vld [vmem:[%s7 + $0x1a0] sm:$0xff]
    %v1489 = vld [vmem:[%s7 + $0x1a8] sm:$0xff]
    %v1490 = vld [vmem:[%s7 + $0x1b0] sm:$0xff]
    %v1491 = vld [vmem:[%s7 + $0x1b8] sm:$0xff]
    %v1492 = vld [vmem:[%s7 + $0x1c0] sm:$0xff]
    %v1493 = vld [vmem:[%s7 + $0x1c8] sm:$0xff]
    %v1494 = vld [vmem:[%s7 + $0x1d0] sm:$0xff]
    %v1495 = vld [vmem:[%s7 + $0x1d8] sm:$0xff]
    %v1496 = vld [vmem:[%s7 + $0x1e0] sm:$0xff]
    %v1497 = vld [vmem:[%s7 + $0x1e8] sm:$0xff]
    %v1498 = vld [vmem:[%s7 + $0x1f0] sm:$0xff]
    %v1499 = vld [vmem:[%s7 + $0x1f8] sm:$0xff]
    %v1501 = vlaneseq
    %v1502 = vshrl.u32 %v1501, 7
    %v1503 = vsub.s32 0, %v1502
    %v1504 = vrot.slane %v279, %v1503
    %v1505 = vlaneseq
    %v1506 = vshrl.u32 %v1505, 7
    %v1507 = vsub.s32 1, %v1506
    %v1508 = vrot.slane %v279, %v1507
    %v1575 = vunpack.c.l.b16 %v1436
    %v1576 = vunpack.c.h.b16 %v1436
    %v1577 = vunpack.c.l.b16 %v1437
    %v1578 = vunpack.c.h.b16 %v1437
    %v1579 = vunpack.c.l.b16 %v1438
    %v1580 = vunpack.c.h.b16 %v1438
    %v1581 = vunpack.c.l.b16 %v1439
    %v1582 = vunpack.c.h.b16 %v1439
    %v1583 = vunpack.c.l.b16 %v1440
    %v1584 = vunpack.c.h.b16 %v1440
    %v1585 = vunpack.c.l.b16 %v1441
    %v1586 = vunpack.c.h.b16 %v1441
    %v1587 = vunpack.c.l.b16 %v1442
    %v1588 = vunpack.c.h.b16 %v1442
    %v1589 = vunpack.c.l.b16 %v1443
    %v1590 = vunpack.c.h.b16 %v1443
    %v1591 = vunpack.c.l.b16 %v1444
    %v1592 = vunpack.c.h.b16 %v1444
    %v1593 = vunpack.c.l.b16 %v1445
    %v1594 = vunpack.c.h.b16 %v1445
    %v1595 = vunpack.c.l.b16 %v1446
    %v1596 = vunpack.c.h.b16 %v1446
    %v1597 = vunpack.c.l.b16 %v1447
    %v1598 = vunpack.c.h.b16 %v1447
    %v1599 = vunpack.c.l.b16 %v1448
    %v1600 = vunpack.c.h.b16 %v1448
    %v1601 = vunpack.c.l.b16 %v1449
    %v1602 = vunpack.c.h.b16 %v1449
    %v1603 = vunpack.c.l.b16 %v1450
    %v1604 = vunpack.c.h.b16 %v1450
    %v1605 = vunpack.c.l.b16 %v1451
    %v1606 = vunpack.c.h.b16 %v1451
    %v1607 = vunpack.c.l.b16 %v1452
    %v1608 = vunpack.c.h.b16 %v1452
    %v1609 = vunpack.c.l.b16 %v1453
    %v1610 = vunpack.c.h.b16 %v1453
    %v1611 = vunpack.c.l.b16 %v1454
    %v1612 = vunpack.c.h.b16 %v1454
    %v1613 = vunpack.c.l.b16 %v1455
    %v1614 = vunpack.c.h.b16 %v1455
    %v1615 = vunpack.c.l.b16 %v1456
    %v1616 = vunpack.c.h.b16 %v1456
    %v1617 = vunpack.c.l.b16 %v1457
    %v1618 = vunpack.c.h.b16 %v1457
    %v1619 = vunpack.c.l.b16 %v1458
    %v1620 = vunpack.c.h.b16 %v1458
    %v1621 = vunpack.c.l.b16 %v1459
    %v1622 = vunpack.c.h.b16 %v1459
    %v1623 = vunpack.c.l.b16 %v1460
    %v1624 = vunpack.c.h.b16 %v1460
    %v1625 = vunpack.c.l.b16 %v1461
    %v1626 = vunpack.c.h.b16 %v1461
    %v1627 = vunpack.c.l.b16 %v1462
    %v1628 = vunpack.c.h.b16 %v1462
    %v1629 = vunpack.c.l.b16 %v1463
    %v1630 = vunpack.c.h.b16 %v1463
    %v1631 = vunpack.c.l.b16 %v1464
    %v1632 = vunpack.c.h.b16 %v1464
    %v1633 = vunpack.c.l.b16 %v1465
    %v1634 = vunpack.c.h.b16 %v1465
    %v1635 = vunpack.c.l.b16 %v1466
    %v1636 = vunpack.c.h.b16 %v1466
    %v1637 = vunpack.c.l.b16 %v1467
    %v1638 = vunpack.c.h.b16 %v1467
    %v1639 = vunpack.c.l.b16 %v1468
    %v1640 = vunpack.c.h.b16 %v1468
    %v1641 = vunpack.c.l.b16 %v1469
    %v1642 = vunpack.c.h.b16 %v1469
    %v1643 = vunpack.c.l.b16 %v1470
    %v1644 = vunpack.c.h.b16 %v1470
    %v1645 = vunpack.c.l.b16 %v1471
    %v1646 = vunpack.c.h.b16 %v1471
    %v1647 = vunpack.c.l.b16 %v1472
    %v1648 = vunpack.c.h.b16 %v1472
    %v1649 = vunpack.c.l.b16 %v1473
    %v1650 = vunpack.c.h.b16 %v1473
    %v1651 = vunpack.c.l.b16 %v1474
    %v1652 = vunpack.c.h.b16 %v1474
    %v1653 = vunpack.c.l.b16 %v1475
    %v1654 = vunpack.c.h.b16 %v1475
    %v1655 = vunpack.c.l.b16 %v1476
    %v1656 = vunpack.c.h.b16 %v1476
    %v1657 = vunpack.c.l.b16 %v1477
    %v1658 = vunpack.c.h.b16 %v1477
    %v1659 = vunpack.c.l.b16 %v1478
    %v1660 = vunpack.c.h.b16 %v1478
    %v1661 = vunpack.c.l.b16 %v1479
    %v1662 = vunpack.c.h.b16 %v1479
    %v1663 = vunpack.c.l.b16 %v1480
    %v1664 = vunpack.c.h.b16 %v1480
    %v1665 = vunpack.c.l.b16 %v1481
    %v1666 = vunpack.c.h.b16 %v1481
    %v1667 = vunpack.c.l.b16 %v1482
    %v1668 = vunpack.c.h.b16 %v1482
    %v1669 = vunpack.c.l.b16 %v1483
    %v1670 = vunpack.c.h.b16 %v1483
    %v1671 = vunpack.c.l.b16 %v1484
    %v1672 = vunpack.c.h.b16 %v1484
    %v1673 = vunpack.c.l.b16 %v1485
    %v1674 = vunpack.c.h.b16 %v1485
    %v1675 = vunpack.c.l.b16 %v1486
    %v1676 = vunpack.c.h.b16 %v1486
    %v1677 = vunpack.c.l.b16 %v1487
    %v1678 = vunpack.c.h.b16 %v1487
    %v1679 = vunpack.c.l.b16 %v1488
    %v1680 = vunpack.c.h.b16 %v1488
    %v1681 = vunpack.c.l.b16 %v1489
    %v1682 = vunpack.c.h.b16 %v1489
    %v1683 = vunpack.c.l.b16 %v1490
    %v1684 = vunpack.c.h.b16 %v1490
    %v1685 = vunpack.c.l.b16 %v1491
    %v1686 = vunpack.c.h.b16 %v1491
    %v1687 = vunpack.c.l.b16 %v1492
    %v1688 = vunpack.c.h.b16 %v1492
    %v1689 = vunpack.c.l.b16 %v1493
    %v1690 = vunpack.c.h.b16 %v1493
    %v1691 = vunpack.c.l.b16 %v1494
    %v1692 = vunpack.c.h.b16 %v1494
    %v1693 = vunpack.c.l.b16 %v1495
    %v1694 = vunpack.c.h.b16 %v1495
    %v1695 = vunpack.c.l.b16 %v1496
    %v1696 = vunpack.c.h.b16 %v1496
    %v1697 = vunpack.c.l.b16 %v1497
    %v1698 = vunpack.c.h.b16 %v1497
    %v1699 = vunpack.c.l.b16 %v1498
    %v1700 = vunpack.c.h.b16 %v1498
    %v1701 = vunpack.c.l.b16 %v1499
    %v1702 = vunpack.c.h.b16 %v1499
    %v1703 = vpack.c.b16 %v1577, %v1575
    %v1704 = vpack.c.b16 %v1578, %v1576
    %v1705 = vpack.c.b16 %v1581, %v1579
    %v1706 = vpack.c.b16 %v1582, %v1580
    %v1707 = vpack.c.b16 %v1585, %v1583
    %v1708 = vpack.c.b16 %v1586, %v1584
    %v1709 = vpack.c.b16 %v1589, %v1587
    %v1710 = vpack.c.b16 %v1590, %v1588
    %v1711 = vpack.c.b16 %v1593, %v1591
    %v1712 = vpack.c.b16 %v1594, %v1592
    %v1713 = vpack.c.b16 %v1597, %v1595
    %v1714 = vpack.c.b16 %v1598, %v1596
    %v1715 = vpack.c.b16 %v1601, %v1599
    %v1716 = vpack.c.b16 %v1602, %v1600
    %v1717 = vpack.c.b16 %v1605, %v1603
    %v1718 = vpack.c.b16 %v1606, %v1604
    %v1719 = vpack.c.b16 %v1609, %v1607
    %v1720 = vpack.c.b16 %v1610, %v1608
    %v1721 = vpack.c.b16 %v1613, %v1611
    %v1722 = vpack.c.b16 %v1614, %v1612
    %v1723 = vpack.c.b16 %v1617, %v1615
    %v1724 = vpack.c.b16 %v1618, %v1616
    %v1725 = vpack.c.b16 %v1621, %v1619
    %v1726 = vpack.c.b16 %v1622, %v1620
    %v1727 = vpack.c.b16 %v1625, %v1623
    %v1728 = vpack.c.b16 %v1626, %v1624
    %v1729 = vpack.c.b16 %v1629, %v1627
    %v1730 = vpack.c.b16 %v1630, %v1628
    %v1731 = vpack.c.b16 %v1633, %v1631
    %v1732 = vpack.c.b16 %v1634, %v1632
    %v1733 = vpack.c.b16 %v1637, %v1635
    %v1734 = vpack.c.b16 %v1638, %v1636
    %v1735 = vpack.c.b16 %v1641, %v1639
    %v1736 = vpack.c.b16 %v1642, %v1640
    %v1737 = vpack.c.b16 %v1645, %v1643
    %v1738 = vpack.c.b16 %v1646, %v1644
    %v1739 = vpack.c.b16 %v1649, %v1647
    %v1740 = vpack.c.b16 %v1650, %v1648
    %v1741 = vpack.c.b16 %v1653, %v1651
    %v1742 = vpack.c.b16 %v1654, %v1652
    %v1743 = vpack.c.b16 %v1657, %v1655
    %v1744 = vpack.c.b16 %v1658, %v1656
    %v1745 = vpack.c.b16 %v1661, %v1659
    %v1746 = vpack.c.b16 %v1662, %v1660
    %v1747 = vpack.c.b16 %v1665, %v1663
    %v1748 = vpack.c.b16 %v1666, %v1664
    %v1749 = vpack.c.b16 %v1669, %v1667
    %v1750 = vpack.c.b16 %v1670, %v1668
    %v1751 = vpack.c.b16 %v1673, %v1671
    %v1752 = vpack.c.b16 %v1674, %v1672
    %v1753 = vpack.c.b16 %v1677, %v1675
    %v1754 = vpack.c.b16 %v1678, %v1676
    %v1755 = vpack.c.b16 %v1681, %v1679
    %v1756 = vpack.c.b16 %v1682, %v1680
    %v1757 = vpack.c.b16 %v1685, %v1683
    %v1758 = vpack.c.b16 %v1686, %v1684
    %v1759 = vpack.c.b16 %v1689, %v1687
    %v1760 = vpack.c.b16 %v1690, %v1688
    %v1761 = vpack.c.b16 %v1693, %v1691
    %v1762 = vpack.c.b16 %v1694, %v1692
    %v1763 = vpack.c.b16 %v1697, %v1695
    %v1764 = vpack.c.b16 %v1698, %v1696
    %v1765 = vpack.c.b16 %v1701, %v1699
    %v1766 = vpack.c.b16 %v1702, %v1700
    %1831 = vmatprep.subr.bf16.mxu0 %v1704
    %1832 = vmatpush1.bf16.msra.mxu0 %v1703
    %1833 = vmatprep.subr.bf16.mxu0 %v1706
    %1834 = vmatpush1.bf16.msra.mxu0 %v1705
    %1835 = vmatprep.subr.bf16.mxu0 %v1708
    %1836 = vmatpush1.bf16.msra.mxu0 %v1707
    %1837 = vmatprep.subr.bf16.mxu0 %v1710
    %1838 = vmatpush1.bf16.msra.mxu0 %v1709
    %1839 = vmatprep.subr.bf16.mxu0 %v1712
    %1840 = vmatpush1.bf16.msra.mxu0 %v1711
    %1841 = vmatprep.subr.bf16.mxu0 %v1714
    %1842 = vmatpush1.bf16.msra.mxu0 %v1713
    %1843 = vmatprep.subr.bf16.mxu0 %v1716
    %1844 = vmatpush1.bf16.msra.mxu0 %v1715
    %1845 = vmatprep.subr.bf16.mxu0 %v1718
    %1846 = vmatpush1.bf16.msra.mxu0 %v1717
    %1847 = vmatprep.subr.bf16.mxu0 %v1720
    %1848 = vmatpush1.bf16.msra.mxu0 %v1719
    %1849 = vmatprep.subr.bf16.mxu0 %v1722
    %1850 = vmatpush1.bf16.msra.mxu0 %v1721
    %1851 = vmatprep.subr.bf16.mxu0 %v1724
    %1852 = vmatpush1.bf16.msra.mxu0 %v1723
    %1853 = vmatprep.subr.bf16.mxu0 %v1726
    %1854 = vmatpush1.bf16.msra.mxu0 %v1725
    %1855 = vmatprep.subr.bf16.mxu0 %v1728
    %1856 = vmatpush1.bf16.msra.mxu0 %v1727
    %1857 = vmatprep.subr.bf16.mxu0 %v1730
    %1858 = vmatpush1.bf16.msra.mxu0 %v1729
    %1859 = vmatprep.subr.bf16.mxu0 %v1732
    %1860 = vmatpush1.bf16.msra.mxu0 %v1731
    %1861 = vmatprep.subr.bf16.mxu0 %v1734
    %1862 = vmatpush1.bf16.msra.mxu0 %v1733
    %1863 = vmatprep.mubr.bf16.mxu0 %v1433
    %1864 = vmatmul.mubr.bf16.gmra.mrb[0].mxu0 %v1432
    %v1865 = vpop.f32.mrb[0].mxu0
    %v1866 = vadd.f32 %v1504, %v1865
    %v1867 = vpop.f32.mrb[0].mxu0
    %v1868 = vadd.f32 %v1508, %v1867
    %v1869 = vpop.f32.mrb[0].mxu0
    %v1870 = vpop.f32.mrb[0].mxu0
    %1871 = vdwg.mxu0
    %1872 = vmatprep.subr.bf16.mxu0 %v1736
    %1873 = vmatpush1.bf16.msra.mxu0 %v1735
    %1874 = vmatprep.subr.bf16.mxu0 %v1738
    %1875 = vmatpush1.bf16.msra.mxu0 %v1737
    %1876 = vmatprep.subr.bf16.mxu0 %v1740
    %1877 = vmatpush1.bf16.msra.mxu0 %v1739
    %1878 = vmatprep.subr.bf16.mxu0 %v1742
    %1879 = vmatpush1.bf16.msra.mxu0 %v1741
    %1880 = vmatprep.subr.bf16.mxu0 %v1744
    %1881 = vmatpush1.bf16.msra.mxu0 %v1743
    %1882 = vmatprep.subr.bf16.mxu0 %v1746
    %1883 = vmatpush1.bf16.msra.mxu0 %v1745
    %1884 = vmatprep.subr.bf16.mxu0 %v1748
    %1885 = vmatpush1.bf16.msra.mxu0 %v1747
    %1886 = vmatprep.subr.bf16.mxu0 %v1750
    %1887 = vmatpush1.bf16.msra.mxu0 %v1749
    %1888 = vmatprep.subr.bf16.mxu0 %v1752
    %1889 = vmatpush1.bf16.msra.mxu0 %v1751
    %1890 = vmatprep.subr.bf16.mxu0 %v1754
    %1891 = vmatpush1.bf16.msra.mxu0 %v1753
    %1892 = vmatprep.subr.bf16.mxu0 %v1756
    %1893 = vmatpush1.bf16.msra.mxu0 %v1755
    %1894 = vmatprep.subr.bf16.mxu0 %v1758
    %1895 = vmatpush1.bf16.msra.mxu0 %v1757
    %1896 = vmatprep.subr.bf16.mxu0 %v1760
    %1897 = vmatpush1.bf16.msra.mxu0 %v1759
    %1898 = vmatprep.subr.bf16.mxu0 %v1762
    %1899 = vmatpush1.bf16.msra.mxu0 %v1761
    %1900 = vmatprep.subr.bf16.mxu0 %v1764
    %1901 = vmatpush1.bf16.msra.mxu0 %v1763
    %1902 = vmatprep.subr.bf16.mxu0 %v1766
    %1903 = vmatpush1.bf16.msra.mxu0 %v1765
    %1904 = vmatprep.mubr.bf16.mxu0 %v1435
    %1905 = vmatmul.mubr.bf16.gmra.mrb[0].mxu0 %v1434
    %v1906 = vpop.f32.mrb[0].mxu0
    %v1907 = vadd.f32 %v1866, %v1906
    %v1908 = vpop.f32.mrb[0].mxu0
    %v1909 = vadd.f32 %v1868, %v1908
    %v1910 = vpop.f32.mrb[0].mxu0
    %v1911 = vpop.f32.mrb[0].mxu0
    %1912 = vdwg.mxu0
    %vm1913 = vcmask 1041408
    %v1914 = vsel %vm1913, %v1907, -inf
    %1915 = vmax.xlane.f32.xlu0 %v1914
    %v1916 = vpop.xlane.xlu0 %1915
    %v1917 = vsub.f32 %v1907, %v1916
    %v1918 = vmul.f32 %v1917, 1.442695
    %v1919 = vpow.pop %v1918
    %v1920 = vsel %vm1913, %v1919, 0.0
    %1921 = vadd.xlane.f32.xlu0 %v1920
    %v1922 = vpop.xlane.xlu0 %1921
    %v1923 = vlog2.pop %v1922
    %v1924 = vmul.f32 %v1923, 0.6931472
    %v1925 = vadd.f32 %v1924, %v1916
    %v1926 = vsub.f32 %v1907, %v1925
    %1927 = vst [vmem:[%s12] sm:$0x3] %v1926
    %v1928 = vsel %vm1913, %v1909, -inf
    %1929 = vmax.xlane.f32.xlu0 %v1928
    %v1930 = vpop.xlane.xlu0 %1929
    %v1931 = vsub.f32 %v1909, %v1930
    %v1932 = vmul.f32 %v1931, 1.442695
    %v1933 = vpow.pop %v1932
    %v1934 = vsel %vm1913, %v1933, 0.0
    %1935 = vadd.xlane.f32.xlu0 %v1934
    %v1936 = vpop.xlane.xlu0 %1935
    %v1937 = vlog2.pop %v1936
    %v1938 = vmul.f32 %v1937, 0.6931472
    %v1939 = vadd.f32 %v1938, %v1930
    %v1940 = vsub.f32 %v1909, %v1939
    %1941 = vst [vmem:[%s12 + $0x2] sm:$0x3] %v1940
    // Predicated region
    $region42: #{forward.1} parent=1 // pred_check
      _
    $region43: #{forward.1} parent=1 // pred_check_branch
      %1943 = sbr.rel (0) target = $region45
    $region44: #{forward.1} parent=1 // pred_region
      %s1945 = ssub.s32 128, 128
      %1946 = vsyncadd [#allocation5], %s1945
      %s1948 = sshll.u32 [#allocation4], 4
      %s1949 = int_to_ptr.vmem [resolvable:$true] %s1948
      %1951 = dma.vmem_to_hbm [thread:$0]  %s1949, 128, %s9, [#allocation5]
    $region45: #{forward.1} parent=1 // pred_fallthru
      _
    // Predicated region
    $region46: #{forward.1} parent=1 // pred_check
      _
    $region47: #{forward.1} parent=1 // pred_check_branch
      %1953 = sbr.rel (0) target = $region49
    $region48: #{forward.1} parent=1 // pred_region
      %s1955 = ssub.s32 32, 32
      %1956 = vsyncadd [#allocation7], %s1955
      %s1958 = sshll.u32 [#allocation6], 4
      %s1959 = int_to_ptr.vmem [resolvable:$true] %s1958
      %1961 = dma.vmem_to_hbm [thread:$0]  %s1959, 32, %s10, [#allocation7]
    $region49: #{forward.1} parent=1 // pred_fallthru
      _
    // Predicated region
    $region50: #{forward.1} parent=1 // pred_check
      _
    $region51: #{forward.1} parent=1 // pred_check_branch
      %1963 = sbr.rel (0) target = $region53
    $region52: #{forward.1} parent=1 // pred_region
      %s1965 = ssub.s32 128, 128
      %1966 = vsyncadd [#allocation7], %s1965
      %s1968 = sshll.u32 [#allocation8], 4
      %s1969 = int_to_ptr.vmem [resolvable:$true] %s1968
      %1971 = dma.vmem_to_hbm [thread:$0]  %s1969, 128, %s11, [#allocation7]
    $region53: #{forward.1} parent=1 // pred_fallthru
      _
    // Predicated region
    $region54: #{forward.1} parent=1 // pred_check
      _
    $region55: #{forward.1} parent=1 // pred_check_branch
      %1973 = sbr.rel (0) target = $region57
    $region56: #{forward.1} parent=1 // pred_region
      _
    $region57: #{forward.1} parent=1 // pred_fallthru
      _
    // Predicated region
    $region58: #{forward.1} parent=1 // pred_check
      _
    $region59: #{forward.1} parent=1 // pred_check_branch
      %1975 = sbr.rel (0) target = $region61
    $region60: #{forward.1} parent=1 // pred_region
      %1976 = dma.done [#allocation5], 128
    $region61: #{forward.1} parent=1 // pred_fallthru
      _
    // Predicated region
    $region62: #{forward.1} parent=1 // pred_check
      _
    $region63: #{forward.1} parent=1 // pred_check_branch
      %1978 = sbr.rel (0) target = $region65
    $region64: #{forward.1} parent=1 // pred_region
      %1979 = dma.done [#allocation7], 32
    $region65: #{forward.1} parent=1 // pred_fallthru
      _
    // Predicated region
    $region66: #{forward.1} parent=1 // pred_check
      _
    $region67: #{forward.1} parent=1 // pred_check_branch
      %1981 = sbr.rel (0) target = $region69
    $region68: #{forward.1} parent=1 // pred_region
      %1982 = dma.done [#allocation7], 128
    $region69: #{forward.1} parent=1 // pred_fallthru
      _
    // Predicated region
    $region70: #{forward.1} parent=1 // pred_check
      _
    $region71: #{forward.1} parent=1 // pred_check_branch
      %1984 = sbr.rel (0) target = $region73
    $region72: #{forward.1} parent=1 // pred_region
      _
    $region73: #{forward.1} parent=1 // pred_fallthru
      _
    %1985 = vsyncpa [#allocation5], 1
    %1986 = vsyncpa [#allocation7], 1

</llo_original>
